<compile_context>
chip_gen: v7x
topology: tpu7x:2x2x1
jax: 0.10.0
libtpu: 0.0.40
codegen_flags: <defaults>
</compile_context>

<pallas_src>
import functools

import jax
import jax.numpy as jnp
import numpy as np
from jax.experimental import pallas as pl
from jax.experimental.pallas import tpu as pltpu


def _round_up(x, m):
    return (x + m - 1) // m * m


# ----------------------------------------------------------------------------
# Pallas kernel: fused 3x3 conv (padding=1) + folded-BN affine + ReLU
# ----------------------------------------------------------------------------
def _conv3x3_bn_relu_kernel(xt_ref, w_ref, scale_ref, bias_ref, out_ref):
    # xt_ref   : (1, 1, th+2, W+2, Cin)  one sample / one row slab (incl. halo)
    # w_ref    : (3, 3, Cin, Cout_p)     HWIO conv weights (Cout padded to 128k)
    # scale_ref: (1, Cout_p)             folded BN scale
    # bias_ref : (1, Cout_p)             folded BN bias (incl. conv bias)
    # out_ref  : (1, th, W, Cout_p)
    _, _, thp, wp, cin = xt_ref.shape
    th, wo = thp - 2, wp - 2
    cout_p = out_ref.shape[-1]

    # 3x3 conv = sum of 9 shifted (th*W, Cin) x (Cin, Cout_p) MXU matmuls,
    # accumulated in a per-tile f32 accumulator (stays in vregs / small VMEM).
    acc = jnp.zeros((th * wo, cout_p), jnp.float32)
    for dy in range(3):
        for dx in range(3):
            patch = xt_ref[0, 0, dy:dy + th, dx:dx + wo, :].reshape(th * wo, cin)
            acc = acc + jnp.dot(patch, w_ref[dy, dx],
                                preferred_element_type=jnp.float32)

    y = acc * scale_ref[...] + bias_ref[...]      # per-channel affine (BN, eval)
    y = jnp.maximum(y, 0.0)                       # ReLU
    out_ref[...] = y.reshape(1, th, wo, cout_p).astype(out_ref.dtype)


def _pick_tile_h(h, w_pad, cin, cout_p, budget_bytes=20 << 20, max_th=64):
    """Largest divisor of `h` (<= max_th) whose double-buffered per-step
    working set (input slab + output tile, f32) fits a VMEM budget sized for
    v7x's 64 MiB VMEM (the smallest across v5e/v6e/v7x)."""
    best = 1
    for th in range(1, min(h, max_th) + 1):
        if h % th:
            continue
        tile_bytes = 2 * 4 * ((th + 2) * w_pad * cin + th * (w_pad - 2) * cout_p)
        if tile_bytes <= budget_bytes:
            best = th
    return best


def conv3x3_bn_relu(x_nhwc, w_hwio, scale, bias, *, tile_h=None):
    """Fused Conv2d(3x3, pad=1) + BN(eval) + ReLU on NHWC input."""
    n, h, w, cin = x_nhwc.shape
    cout = w_hwio.shape[-1]

    # Pad Cout to a multiple of 128: full-width MXU N dim + lane-dense stores.
    # Padded channels compute to exactly zero and are sliced off below.
    cout_p = _round_up(cout, 128)
    if cout_p != cout:
        pc = cout_p - cout
        w_hwio = jnp.pad(w_hwio, ((0, 0), (0, 0), (0, 0), (0, pc)))
        scale = jnp.pad(scale, ((0, 0), (0, pc)))
        bias = jnp.pad(bias, ((0, 0), (0, pc)))

    if tile_h is None:
        tile_h = _pick_tile_h(h, w + 2, cin, cout_p)
    assert h % tile_h == 0, (h, tile_h)
    n_tiles = h // tile_h

    # Spatial zero padding + overlapping row slabs: each H tile carries its
    # own 1-row halo so the kernel uses plain Blocked (non-overlapping) blocks.
    xpad = jnp.pad(x_nhwc, ((0, 0), (1, 1), (1, 1), (0, 0)))
    xt = jnp.stack(
        [xpad[:, i * tile_h: i * tile_h + tile_h + 2] for i in range(n_tiles)],
        axis=1)                                   # (N, n_tiles, th+2, W+2, Cin)

    flops = 2 * n * h * w * 9 * cin * cout_p
    bytes_accessed = 4 * (xt.size + w_hwio.size + n * h * w * cout_p)

    out = pl.pallas_call(
        _conv3x3_bn_relu_kernel,
        out_shape=jax.ShapeDtypeStruct((n, h, w, cout_p), x_nhwc.dtype),
        grid=(n, n_tiles),
        in_specs=[
            pl.BlockSpec((1, 1, tile_h + 2, w + 2, cin),
                         lambda b, i: (b, i, 0, 0, 0)),
            pl.BlockSpec((3, 3, cin, cout_p), lambda b, i: (0, 0, 0, 0)),
            pl.BlockSpec((1, cout_p), lambda b, i: (0, 0)),
            pl.BlockSpec((1, cout_p), lambda b, i: (0, 0)),
        ],
        out_specs=pl.BlockSpec((1, tile_h, w, cout_p),
                               lambda b, i: (b, i, 0, 0)),
        compiler_params=pltpu.CompilerParams(
            dimension_semantics=("parallel", "parallel"),
            vmem_limit_bytes=48 << 20),
        cost_estimate=pl.CostEstimate(flops=flops, transcendentals=0,
                                      bytes_accessed=bytes_accessed),
    )(xt, w_hwio, scale, bias)

    return out[..., :cout] if cout_p != cout else out


# ----------------------------------------------------------------------------
# Parameter construction (deterministic, synthetic)
# ----------------------------------------------------------------------------
def _fold_bn(gamma, beta, running_mean, running_var, conv_bias, eps=1e-5):
    scale = gamma / jnp.sqrt(running_var + eps)
    bias = beta + (conv_bias - running_mean) * scale
    return scale[None, :], bias[None, :]


def make_decoder_block_params(key, in_channels, skip_channels, out_channels):
    c1_in = in_channels + skip_channels
    ks = jax.random.split(key, 12)
    p = {}
    # conv1: weight (HWIO), bias, BN params
    p["w1"] = 0.1 * jax.random.normal(ks[0], (3, 3, c1_in, out_channels), jnp.float32)
    b1 = 0.05 * jax.random.normal(ks[1], (out_channels,), jnp.float32)
    g1 = 1.0 + 0.1 * jax.random.normal(ks[2], (out_channels,), jnp.float32)
    be1 = 0.1 * jax.random.normal(ks[3], (out_channels,), jnp.float32)
    rm1 = 0.1 * jax.random.normal(ks[4], (out_channels,), jnp.float32)
    rv1 = 0.5 + jnp.abs(0.2 * jax.random.normal(ks[5], (out_channels,), jnp.float32))
    p["scale1"], p["bias1"] = _fold_bn(g1, be1, rm1, rv1, b1)
    # conv2
    p["w2"] = 0.1 * jax.random.normal(ks[6], (3, 3, out_channels, out_channels), jnp.float32)
    b2 = 0.05 * jax.random.normal(ks[7], (out_channels,), jnp.float32)
    g2 = 1.0 + 0.1 * jax.random.normal(ks[8], (out_channels,), jnp.float32)
    be2 = 0.1 * jax.random.normal(ks[9], (out_channels,), jnp.float32)
    rm2 = 0.1 * jax.random.normal(ks[10], (out_channels,), jnp.float32)
    rv2 = 0.5 + jnp.abs(0.2 * jax.random.normal(ks[11], (out_channels,), jnp.float32))
    p["scale2"], p["bias2"] = _fold_bn(g2, be2, rm2, rv2, b2)
    return p


# ----------------------------------------------------------------------------
# DecoderBlock forward (NCHW in / NCHW out, matching the PyTorch module)
# ----------------------------------------------------------------------------
@functools.partial(jax.jit, static_argnames=("tile_h",))
def decoder_block_forward(params, x_nchw, skip_nchw, tile_h=None):
    x = jnp.transpose(x_nchw, (0, 2, 3, 1))                    # NCHW -> NHWC
    x = jnp.repeat(jnp.repeat(x, 2, axis=1), 2, axis=2)        # nearest 2x up
    if skip_nchw is not None:
        skip = jnp.transpose(skip_nchw, (0, 2, 3, 1))
        x = jnp.concatenate([x, skip], axis=-1)                # channel concat
    x = conv3x3_bn_relu(x, params["w1"], params["scale1"], params["bias1"],
                        tile_h=tile_h)
    x = conv3x3_bn_relu(x, params["w2"], params["scale2"], params["bias2"],
                        tile_h=tile_h)
    return jnp.transpose(x, (0, 3, 1, 2))                      # NHWC -> NCHW


# Pure-JAX reference for correctness checking
def _ref_forward(params, x_nchw, skip_nchw):
    x = jnp.transpose(x_nchw, (0, 2, 3, 1))
    x = jnp.repeat(jnp.repeat(x, 2, axis=1), 2, axis=2)
    if skip_nchw is not None:
        skip = jnp.transpose(skip_nchw, (0, 2, 3, 1))
        x = jnp.concatenate([x, skip], axis=-1)

    def conv_bn_relu(x, w, s, b):
        y = jax.lax.conv_general_dilated(
            x, w, window_strides=(1, 1), padding="SAME",
            dimension_numbers=("NHWC", "HWIO", "NHWC"))
        return jnp.maximum(y * s + b, 0.0)

    x = conv_bn_relu(x, params["w1"], params["scale1"], params["bias1"])
    x = conv_bn_relu(x, params["w2"], params["scale2"], params["bias2"])
    return jnp.transpose(x, (0, 3, 1, 2))


if __name__ == "__main__":
    key = jax.random.PRNGKey(0)
    k_x, k_skip, k_p = jax.random.split(key, 3)

    N = 2
    in_channels, skip_channels, out_channels = 4, 4, 8
    Hs, Ws = 8, 8                       # x spatial; upsampled to 16x16
    Hk, Wk = 2 * Hs, 2 * Ws             # skip spatial

    x = jax.random.normal(k_x, (N, in_channels, Hs, Ws), jnp.float32)
    skip = jax.random.normal(k_skip, (N, skip_channels, Hk, Wk), jnp.float32)
    params = make_decoder_block_params(k_p, in_channels, skip_channels, out_channels)

    # tile_h=8 -> 2 row-tiles per image: exercises the halo/tiling path.
    out = decoder_block_forward(params, x, skip, tile_h=8)
    out = jax.block_until_ready(out)

    ref = jax.block_until_ready(_ref_forward(params, x, skip))
    assert out.shape == (N, out_channels, Hk, Wk), out.shape
    np.testing.assert_allclose(np.asarray(out), np.asarray(ref),
                               rtol=1e-3, atol=1e-3)
    print("KERNEL_OK")
</pallas_src>

<mosaic_0001>
module attributes {stable_mosaic.version = 11 : i64} {
  func.func @_conv3x3_bn_relu_kernel(%arg0: i32, %arg1: i32, %arg2: memref<1x1x10x18x8xf32, #tpu.memory_space<vmem>>, %arg3: memref<3x3x8x128xf32, #tpu.memory_space<vmem>>, %arg4: memref<1x128xf32, #tpu.memory_space<vmem>>, %arg5: memref<1x128xf32, #tpu.memory_space<vmem>>, %arg6: memref<1x8x16x128xf32, #tpu.memory_space<vmem>>) attributes {dimension_semantics = [#tpu.dimension_semantics<parallel>, #tpu.dimension_semantics<parallel>], iteration_bounds = array<i64: 2, 2>, scalar_prefetch = 0 : i64, scratch_operands = 0 : i64, tpu.core_type = #tpu.core_type<tc>, window_params = [{transform_indices = @transform_0, window_bounds = array<i64: 1, 1, 10, 18, 8>}, {pipeline_mode = #tpu.pipeline_mode<synchronous>, transform_indices = @transform_1, window_bounds = array<i64: 3, 3, 8, 128>}, {pipeline_mode = #tpu.pipeline_mode<synchronous>, transform_indices = @transform_2, window_bounds = array<i64: 1, 128>}, {pipeline_mode = #tpu.pipeline_mode<synchronous>, transform_indices = @transform_3, window_bounds = array<i64: 1, 128>}, {transform_indices = @transform_4, window_bounds = array<i64: 1, 8, 16, 128>}]} {
    %cst = arith.constant 0.000000e+00 : f32
    %0 = vector.broadcast %cst : f32 to vector<128x128xf32>
    %c0 = arith.constant 0 : index
    %c0_0 = arith.constant 0 : index
    %c0_1 = arith.constant 0 : index
    %c0_2 = arith.constant 0 : index
    %c0_3 = arith.constant 0 : index
    %1 = vector.load %arg2[%c0, %c0_0, %c0_1, %c0_2, %c0_3] : memref<1x1x10x18x8xf32, #tpu.memory_space<vmem>>, vector<1x1x8x16x8xf32>
    %2 = vector.shape_cast %1 : vector<1x1x8x16x8xf32> to vector<8x16x8xf32>
    %3 = vector.shape_cast %2 : vector<8x16x8xf32> to vector<128x8xf32>
    %c0_4 = arith.constant 0 : index
    %c0_5 = arith.constant 0 : index
    %c0_6 = arith.constant 0 : index
    %c0_7 = arith.constant 0 : index
    %4 = vector.load %arg3[%c0_4, %c0_5, %c0_6, %c0_7] : memref<3x3x8x128xf32, #tpu.memory_space<vmem>>, vector<1x1x8x128xf32>
    %5 = vector.shape_cast %4 : vector<1x1x8x128xf32> to vector<8x128xf32>
    %cst_8 = arith.constant dense<0.000000e+00> : vector<128x128xf32>
    %6 = tpu.matmul %3, %5, %cst_8 {dimension_numbers = #tpu.dot_dimension_numbers<[1], [0], [0], [1], [0, 0, 1, 1], [], []>} : vector<128x8xf32>, vector<8x128xf32>, vector<128x128xf32> -> vector<128x128xf32>
    %7 = arith.addf %0, %6 : vector<128x128xf32>
    %c0_9 = arith.constant 0 : index
    %c0_10 = arith.constant 0 : index
    %c0_11 = arith.constant 0 : index
    %c1 = arith.constant 1 : index
    %c0_12 = arith.constant 0 : index
    %8 = vector.load %arg2[%c0_9, %c0_10, %c0_11, %c1, %c0_12] : memref<1x1x10x18x8xf32, #tpu.memory_space<vmem>>, vector<1x1x8x16x8xf32>
    %9 = vector.shape_cast %8 : vector<1x1x8x16x8xf32> to vector<8x16x8xf32>
    %10 = vector.shape_cast %9 : vector<8x16x8xf32> to vector<128x8xf32>
    %c0_13 = arith.constant 0 : index
    %c1_14 = arith.constant 1 : index
    %c0_15 = arith.constant 0 : index
    %c0_16 = arith.constant 0 : index
    %11 = vector.load %arg3[%c0_13, %c1_14, %c0_15, %c0_16] : memref<3x3x8x128xf32, #tpu.memory_space<vmem>>, vector<1x1x8x128xf32>
    %12 = vector.shape_cast %11 : vector<1x1x8x128xf32> to vector<8x128xf32>
    %cst_17 = arith.constant dense<0.000000e+00> : vector<128x128xf32>
    %13 = tpu.matmul %10, %12, %cst_17 {dimension_numbers = #tpu.dot_dimension_numbers<[1], [0], [0], [1], [0, 0, 1, 1], [], []>} : vector<128x8xf32>, vector<8x128xf32>, vector<128x128xf32> -> vector<128x128xf32>
    %14 = arith.addf %7, %13 : vector<128x128xf32>
    %c0_18 = arith.constant 0 : index
    %c0_19 = arith.constant 0 : index
    %c0_20 = arith.constant 0 : index
    %c2 = arith.constant 2 : index
    %c0_21 = arith.constant 0 : index
    %15 = vector.load %arg2[%c0_18, %c0_19, %c0_20, %c2, %c0_21] : memref<1x1x10x18x8xf32, #tpu.memory_space<vmem>>, vector<1x1x8x16x8xf32>
    %16 = vector.shape_cast %15 : vector<1x1x8x16x8xf32> to vector<8x16x8xf32>
    %17 = vector.shape_cast %16 : vector<8x16x8xf32> to vector<128x8xf32>
    %c0_22 = arith.constant 0 : index
    %c2_23 = arith.constant 2 : index
    %c0_24 = arith.constant 0 : index
    %c0_25 = arith.constant 0 : index
    %18 = vector.load %arg3[%c0_22, %c2_23, %c0_24, %c0_25] : memref<3x3x8x128xf32, #tpu.memory_space<vmem>>, vector<1x1x8x128xf32>
    %19 = vector.shape_cast %18 : vector<1x1x8x128xf32> to vector<8x128xf32>
    %cst_26 = arith.constant dense<0.000000e+00> : vector<128x128xf32>
    %20 = tpu.matmul %17, %19, %cst_26 {dimension_numbers = #tpu.dot_dimension_numbers<[1], [0], [0], [1], [0, 0, 1, 1], [], []>} : vector<128x8xf32>, vector<8x128xf32>, vector<128x128xf32> -> vector<128x128xf32>
    %21 = arith.addf %14, %20 : vector<128x128xf32>
    %c0_27 = arith.constant 0 : index
    %c0_28 = arith.constant 0 : index
    %c1_29 = arith.constant 1 : index
    %c0_30 = arith.constant 0 : index
    %c0_31 = arith.constant 0 : index
    %22 = vector.load %arg2[%c0_27, %c0_28, %c1_29, %c0_30, %c0_31] : memref<1x1x10x18x8xf32, #tpu.memory_space<vmem>>, vector<1x1x8x16x8xf32>
    %23 = vector.shape_cast %22 : vector<1x1x8x16x8xf32> to vector<8x16x8xf32>
    %24 = vector.shape_cast %23 : vector<8x16x8xf32> to vector<128x8xf32>
    %c1_32 = arith.constant 1 : index
    %c0_33 = arith.constant 0 : index
    %c0_34 = arith.constant 0 : index
    %c0_35 = arith.constant 0 : index
    %25 = vector.load %arg3[%c1_32, %c0_33, %c0_34, %c0_35] : memref<3x3x8x128xf32, #tpu.memory_space<vmem>>, vector<1x1x8x128xf32>
    %26 = vector.shape_cast %25 : vector<1x1x8x128xf32> to vector<8x128xf32>
    %cst_36 = arith.constant dense<0.000000e+00> : vector<128x128xf32>
    %27 = tpu.matmul %24, %26, %cst_36 {dimension_numbers = #tpu.dot_dimension_numbers<[1], [0], [0], [1], [0, 0, 1, 1], [], []>} : vector<128x8xf32>, vector<8x128xf32>, vector<128x128xf32> -> vector<128x128xf32>
    %28 = arith.addf %21, %27 : vector<128x128xf32>
    %c0_37 = arith.constant 0 : index
    %c0_38 = arith.constant 0 : index
    %c1_39 = arith.constant 1 : index
    %c1_40 = arith.constant 1 : index
    %c0_41 = arith.constant 0 : index
    %29 = vector.load %arg2[%c0_37, %c0_38, %c1_39, %c1_40, %c0_41] : memref<1x1x10x18x8xf32, #tpu.memory_space<vmem>>, vector<1x1x8x16x8xf32>
    %30 = vector.shape_cast %29 : vector<1x1x8x16x8xf32> to vector<8x16x8xf32>
    %31 = vector.shape_cast %30 : vector<8x16x8xf32> to vector<128x8xf32>
    %c1_42 = arith.constant 1 : index
    %c1_43 = arith.constant 1 : index
    %c0_44 = arith.constant 0 : index
    %c0_45 = arith.constant 0 : index
    %32 = vector.load %arg3[%c1_42, %c1_43, %c0_44, %c0_45] : memref<3x3x8x128xf32, #tpu.memory_space<vmem>>, vector<1x1x8x128xf32>
    %33 = vector.shape_cast %32 : vector<1x1x8x128xf32> to vector<8x128xf32>
    %cst_46 = arith.constant dense<0.000000e+00> : vector<128x128xf32>
    %34 = tpu.matmul %31, %33, %cst_46 {dimension_numbers = #tpu.dot_dimension_numbers<[1], [0], [0], [1], [0, 0, 1, 1], [], []>} : vector<128x8xf32>, vector<8x128xf32>, vector<128x128xf32> -> vector<128x128xf32>
    %35 = arith.addf %28, %34 : vector<128x128xf32>
    %c0_47 = arith.constant 0 : index
    %c0_48 = arith.constant 0 : index
    %c1_49 = arith.constant 1 : index
    %c2_50 = arith.constant 2 : index
    %c0_51 = arith.constant 0 : index
    %36 = vector.load %arg2[%c0_47, %c0_48, %c1_49, %c2_50, %c0_51] : memref<1x1x10x18x8xf32, #tpu.memory_space<vmem>>, vector<1x1x8x16x8xf32>
    %37 = vector.shape_cast %36 : vector<1x1x8x16x8xf32> to vector<8x16x8xf32>
    %38 = vector.shape_cast %37 : vector<8x16x8xf32> to vector<128x8xf32>
    %c1_52 = arith.constant 1 : index
    %c2_53 = arith.constant 2 : index
    %c0_54 = arith.constant 0 : index
    %c0_55 = arith.constant 0 : index
    %39 = vector.load %arg3[%c1_52, %c2_53, %c0_54, %c0_55] : memref<3x3x8x128xf32, #tpu.memory_space<vmem>>, vector<1x1x8x128xf32>
    %40 = vector.shape_cast %39 : vector<1x1x8x128xf32> to vector<8x128xf32>
    %cst_56 = arith.constant dense<0.000000e+00> : vector<128x128xf32>
    %41 = tpu.matmul %38, %40, %cst_56 {dimension_numbers = #tpu.dot_dimension_numbers<[1], [0], [0], [1], [0, 0, 1, 1], [], []>} : vector<128x8xf32>, vector<8x128xf32>, vector<128x128xf32> -> vector<128x128xf32>
    %42 = arith.addf %35, %41 : vector<128x128xf32>
    %c0_57 = arith.constant 0 : index
    %c0_58 = arith.constant 0 : index
    %c2_59 = arith.constant 2 : index
    %c0_60 = arith.constant 0 : index
    %c0_61 = arith.constant 0 : index
    %43 = vector.load %arg2[%c0_57, %c0_58, %c2_59, %c0_60, %c0_61] : memref<1x1x10x18x8xf32, #tpu.memory_space<vmem>>, vector<1x1x8x16x8xf32>
    %44 = vector.shape_cast %43 : vector<1x1x8x16x8xf32> to vector<8x16x8xf32>
    %45 = vector.shape_cast %44 : vector<8x16x8xf32> to vector<128x8xf32>
    %c2_62 = arith.constant 2 : index
    %c0_63 = arith.constant 0 : index
    %c0_64 = arith.constant 0 : index
    %c0_65 = arith.constant 0 : index
    %46 = vector.load %arg3[%c2_62, %c0_63, %c0_64, %c0_65] : memref<3x3x8x128xf32, #tpu.memory_space<vmem>>, vector<1x1x8x128xf32>
    %47 = vector.shape_cast %46 : vector<1x1x8x128xf32> to vector<8x128xf32>
    %cst_66 = arith.constant dense<0.000000e+00> : vector<128x128xf32>
    %48 = tpu.matmul %45, %47, %cst_66 {dimension_numbers = #tpu.dot_dimension_numbers<[1], [0], [0], [1], [0, 0, 1, 1], [], []>} : vector<128x8xf32>, vector<8x128xf32>, vector<128x128xf32> -> vector<128x128xf32>
    %49 = arith.addf %42, %48 : vector<128x128xf32>
    %c0_67 = arith.constant 0 : index
    %c0_68 = arith.constant 0 : index
    %c2_69 = arith.constant 2 : index
    %c1_70 = arith.constant 1 : index
    %c0_71 = arith.constant 0 : index
    %50 = vector.load %arg2[%c0_67, %c0_68, %c2_69, %c1_70, %c0_71] : memref<1x1x10x18x8xf32, #tpu.memory_space<vmem>>, vector<1x1x8x16x8xf32>
    %51 = vector.shape_cast %50 : vector<1x1x8x16x8xf32> to vector<8x16x8xf32>
    %52 = vector.shape_cast %51 : vector<8x16x8xf32> to vector<128x8xf32>
    %c2_72 = arith.constant 2 : index
    %c1_73 = arith.constant 1 : index
    %c0_74 = arith.constant 0 : index
    %c0_75 = arith.constant 0 : index
    %53 = vector.load %arg3[%c2_72, %c1_73, %c0_74, %c0_75] : memref<3x3x8x128xf32, #tpu.memory_space<vmem>>, vector<1x1x8x128xf32>
    %54 = vector.shape_cast %53 : vector<1x1x8x128xf32> to vector<8x128xf32>
    %cst_76 = arith.constant dense<0.000000e+00> : vector<128x128xf32>
    %55 = tpu.matmul %52, %54, %cst_76 {dimension_numbers = #tpu.dot_dimension_numbers<[1], [0], [0], [1], [0, 0, 1, 1], [], []>} : vector<128x8xf32>, vector<8x128xf32>, vector<128x128xf32> -> vector<128x128xf32>
    %56 = arith.addf %49, %55 : vector<128x128xf32>
    %c0_77 = arith.constant 0 : index
    %c0_78 = arith.constant 0 : index
    %c2_79 = arith.constant 2 : index
    %c2_80 = arith.constant 2 : index
    %c0_81 = arith.constant 0 : index
    %57 = vector.load %arg2[%c0_77, %c0_78, %c2_79, %c2_80, %c0_81] : memref<1x1x10x18x8xf32, #tpu.memory_space<vmem>>, vector<1x1x8x16x8xf32>
    %58 = vector.shape_cast %57 : vector<1x1x8x16x8xf32> to vector<8x16x8xf32>
    %59 = vector.shape_cast %58 : vector<8x16x8xf32> to vector<128x8xf32>
    %c2_82 = arith.constant 2 : index
    %c2_83 = arith.constant 2 : index
    %c0_84 = arith.constant 0 : index
    %c0_85 = arith.constant 0 : index
    %60 = vector.load %arg3[%c2_82, %c2_83, %c0_84, %c0_85] : memref<3x3x8x128xf32, #tpu.memory_space<vmem>>, vector<1x1x8x128xf32>
    %61 = vector.shape_cast %60 : vector<1x1x8x128xf32> to vector<8x128xf32>
    %cst_86 = arith.constant dense<0.000000e+00> : vector<128x128xf32>
    %62 = tpu.matmul %59, %61, %cst_86 {dimension_numbers = #tpu.dot_dimension_numbers<[1], [0], [0], [1], [0, 0, 1, 1], [], []>} : vector<128x8xf32>, vector<8x128xf32>, vector<128x128xf32> -> vector<128x128xf32>
    %63 = arith.addf %56, %62 : vector<128x128xf32>
    %c0_87 = arith.constant 0 : index
    %c0_88 = arith.constant 0 : index
    %64 = vector.load %arg4[%c0_87, %c0_88] : memref<1x128xf32, #tpu.memory_space<vmem>>, vector<1x128xf32>
    %65 = vector.broadcast %64 : vector<1x128xf32> to vector<128x128xf32>
    %66 = arith.mulf %63, %65 : vector<128x128xf32>
    %c0_89 = arith.constant 0 : index
    %c0_90 = arith.constant 0 : index
    %67 = vector.load %arg5[%c0_89, %c0_90] : memref<1x128xf32, #tpu.memory_space<vmem>>, vector<1x128xf32>
    %68 = vector.broadcast %67 : vector<1x128xf32> to vector<128x128xf32>
    %69 = arith.addf %66, %68 : vector<128x128xf32>
    %cst_91 = arith.constant 0.000000e+00 : f32
    %70 = vector.broadcast %cst_91 : f32 to vector<128x128xf32>
    %71 = arith.maximumf %69, %70 : vector<128x128xf32>
    %72 = vector.shape_cast %71 : vector<128x128xf32> to vector<1x8x16x128xf32>
    %c0_92 = arith.constant 0 : index
    %c0_93 = arith.constant 0 : index
    %c0_94 = arith.constant 0 : index
    %c0_95 = arith.constant 0 : index
    %73 = vector.load %arg6[%c0_92, %c0_93, %c0_94, %c0_95] : memref<1x8x16x128xf32, #tpu.memory_space<vmem>>, vector<1x8x16x128xf32>
    tpu.vector_store %arg6[%c0_92, %c0_93, %c0_94, %c0_95], %72 {strides = array<i32>} : memref<1x8x16x128xf32, #tpu.memory_space<vmem>>, vector<1x8x16x128xf32>,
    return
  }
  func.func @transform_0(%arg0: i32, %arg1: i32) -> (i32, i32, i32, i32, i32) {
    %c0_i32 = arith.constant 0 : i32
    %c0_i32_0 = arith.constant 0 : i32
    %c0_i32_1 = arith.constant 0 : i32
    %c0_i32_2 = arith.constant 0 : i32
    return %arg0, %arg1, %c0_i32, %c0_i32_0, %c0_i32_1 : i32, i32, i32, i32, i32
  }
  func.func @transform_1(%arg0: i32, %arg1: i32) -> (i32, i32, i32, i32) {
    %c0_i32 = arith.constant 0 : i32
    %c0_i32_0 = arith.constant 0 : i32
    %c0_i32_1 = arith.constant 0 : i32
    %c0_i32_2 = arith.constant 0 : i32
    %c0_i32_3 = arith.constant 0 : i32
    return %c0_i32, %c0_i32_0, %c0_i32_1, %c0_i32_2 : i32, i32, i32, i32
  }
  func.func @transform_2(%arg0: i32, %arg1: i32) -> (i32, i32) {
    %c0_i32 = arith.constant 0 : i32
    %c0_i32_0 = arith.constant 0 : i32
    %c0_i32_1 = arith.constant 0 : i32
    return %c0_i32, %c0_i32_0 : i32, i32
  }
  func.func @transform_3(%arg0: i32, %arg1: i32) -> (i32, i32) {
    %c0_i32 = arith.constant 0 : i32
    %c0_i32_0 = arith.constant 0 : i32
    %c0_i32_1 = arith.constant 0 : i32
    return %c0_i32, %c0_i32_0 : i32, i32
  }
  func.func @transform_4(%arg0: i32, %arg1: i32) -> (i32, i32, i32, i32) {
    %c0_i32 = arith.constant 0 : i32
    %c0_i32_0 = arith.constant 0 : i32
    %c0_i32_1 = arith.constant 0 : i32
    return %arg0, %arg1, %c0_i32, %c0_i32_0 : i32, i32, i32, i32
  }
}

</mosaic_0001>

<llo_original>
// kernel: decoder_block_forward.2
$region0: #{decoder_block_forward.2}
  #allocation0 [shape = 'u32[]', space=smem, size = 0x4, offset = 0x4, fixed_abs, tag = 'smem constant byte address 0x4 - core index']
  #allocation1 [shape = 'u32[144,128]{1,0:T(1,128)}', space=vmem, size = 0x12000, scoped, tag = 'internal scratch']
  %s0 = inlined_call_operand.vmem [shape: f32[2,2,10,18,8], index: 0, kind: input, shape index: {}]
  %s1 = inlined_call_operand.vmem [shape: f32[3,3,8,128], index: 1, kind: input, shape index: {}]
  %s2 = inlined_call_operand.vmem [shape: f32[1,128], index: 2, kind: input, shape index: {}]
  %s3 = inlined_call_operand.vmem [shape: f32[1,128], index: 3, kind: input, shape index: {}]
  %s4 = inlined_call_operand.vmem [shape: f32[2,16,16,128], index: 4, kind: output, shape index: {}]
  %s5 = sld [smem:[#allocation0]]
  $region49: #{decoder_block_forward.2} parent=0
    _
  %s7 = ssub.s32 1, %s5
  %s8 = scalar_select 0, %s7, %s5
  loop: start=0, step=1, limit=6
  $region2: #{decoder_block_forward.2} parent=0 // loop_pre_header
    _
  $region3: #{decoder_block_forward.2} parent=0 // loop_header
    %s10 = sphi 0, %s14
    %p11 = scmp.ge.s32.totalorder %s10, 6
    %s17 = sphi 0, %s29
    %s18 = sphi 0, %s25
    %s19 = sphi 0, %s17
    %s20 = sphi 0, %s18
    %s21 = sphi 0, %s19
    %s22 = sphi 0, %s20
    %s34 = sphi 0, %s36
    %s37 = sphi 0, %s34
    %s38 = sphi 0, %s37
    %s54 = sphi 0, %s38
    %s58 = sphi 0, %s58
    %s60 = sphi 0, %s58
    %s61 = sphi 0, %s60
    %s75 = sphi 0, %s61
    %s79 = sphi 0, %s79
    %s81 = sphi 0, %s79
    %s82 = sphi 0, %s81
    %s96 = sphi 0, %s82
    %s100 = sphi 0, %s100
    %s102 = sphi 0, %s100
    %s103 = sphi 0, %s102
    %s117 = sphi 0, %s103
    %s125 = sphi 0, %s127
    %s128 = sphi 0, %s125
    %s129 = sphi 0, %s128
    %s145 = sphi 0, %s129
  $region4: #{decoder_block_forward.2} parent=0 // loop_header_branch
    %13 = sbr.rel (%p11) target = $region8
  $region5: #{decoder_block_forward.2} parent=0 // loop_body
    %s15 = ssub.s32 %s10, 1
    %s16 = ssub.s32 %s10, 2
    %s23 = sadd.s32 1, %s18
    %p24 = scmp.ge.s32.totalorder %s23, 2
    %s25 = scalar_select %p24, 0, %s23
    %s26 = sadd.s32 1, %s17
    %s27 = scalar_select %p24, %s26, %s17
    %p28 = scmp.ge.s32.totalorder %s27, 2
    %s29 = scalar_select %p28, 0, %s27
    %s30 = ssub.s32 %s17, %s29
    %s31 = ssub.s32 %s18, %s25
    %s32 = sor.u32 %s30, %s31
    %p33 = scmp.eq.s32.totalorder %s32, 0
    %s35 = sadd.s32 %s34, 1
    %s36 = scalar_select %p33, %s34, %s35
    %p39 = pneg %p33
    %p40 = scmp.eq.s32.totalorder %s10, 3
    %p41 = por %p39, %p40
    %p42 = scmp.ne.s32.totalorder %s34, %s37
    %p43 = scmp.eq.s32.totalorder %s10, 0
    %p44 = por %p42, %p43
    %p45 = scmp.ne.s32.totalorder %s34, %s37
    %p46 = scmp.eq.s32.totalorder %s15, 3
    %p47 = por %p45, %p46
    %p48 = scmp.ne.s32.totalorder %s37, %s38
    %p49 = scmp.eq.s32.totalorder %s15, 0
    %p50 = por %p48, %p49
    %p51 = scmp.ne.s32.totalorder %s37, %s38
    %p52 = scmp.eq.s32.totalorder %s16, 3
    %p53 = por %p51, %p52
    %p55 = scmp.ne.s32.totalorder %s38, %s54
    %p56 = scmp.eq.s32.totalorder %s16, 0
    %p57 = por %p55, %p56
    %s59 = sadd.s32 %s58, 1
    %p62 = scmp.eq.s32.totalorder %s10, 3
    %p63 = scmp.ne.s32.totalorder %s58, %s60
    %p64 = scmp.eq.s32.totalorder %s10, 0
    %p65 = por %p63, %p64
    %p66 = scmp.ne.s32.totalorder %s58, %s60
    %p67 = scmp.eq.s32.totalorder %s15, 3
    %p68 = por %p66, %p67
    %p69 = scmp.ne.s32.totalorder %s60, %s61
    %p70 = scmp.eq.s32.totalorder %s15, 0
    %p71 = por %p69, %p70
    %p72 = scmp.ne.s32.totalorder %s60, %s61
    %p73 = scmp.eq.s32.totalorder %s16, 3
    %p74 = por %p72, %p73
    %p76 = scmp.ne.s32.totalorder %s61, %s75
    %p77 = scmp.eq.s32.totalorder %s16, 0
    %p78 = por %p76, %p77
    %s80 = sadd.s32 %s79, 1
    %p83 = scmp.eq.s32.totalorder %s10, 3
    %p84 = scmp.ne.s32.totalorder %s79, %s81
    %p85 = scmp.eq.s32.totalorder %s10, 0
    %p86 = por %p84, %p85
    %p87 = scmp.ne.s32.totalorder %s79, %s81
    %p88 = scmp.eq.s32.totalorder %s15, 3
    %p89 = por %p87, %p88
    %p90 = scmp.ne.s32.totalorder %s81, %s82
    %p91 = scmp.eq.s32.totalorder %s15, 0
    %p92 = por %p90, %p91
    %p93 = scmp.ne.s32.totalorder %s81, %s82
    %p94 = scmp.eq.s32.totalorder %s16, 3
    %p95 = por %p93, %p94
    %p97 = scmp.ne.s32.totalorder %s82, %s96
    %p98 = scmp.eq.s32.totalorder %s16, 0
    %p99 = por %p97, %p98
    %s101 = sadd.s32 %s100, 1
    %p104 = scmp.eq.s32.totalorder %s10, 3
    %p105 = scmp.ne.s32.totalorder %s100, %s102
    %p106 = scmp.eq.s32.totalorder %s10, 0
    %p107 = por %p105, %p106
    %p108 = scmp.ne.s32.totalorder %s100, %s102
    %p109 = scmp.eq.s32.totalorder %s15, 3
    %p110 = por %p108, %p109
    %p111 = scmp.ne.s32.totalorder %s102, %s103
    %p112 = scmp.eq.s32.totalorder %s15, 0
    %p113 = por %p111, %p112
    %p114 = scmp.ne.s32.totalorder %s102, %s103
    %p115 = scmp.eq.s32.totalorder %s16, 3
    %p116 = por %p114, %p115
    %p118 = scmp.ne.s32.totalorder %s103, %s117
    %p119 = scmp.eq.s32.totalorder %s16, 0
    %p120 = por %p118, %p119
    %s121 = ssub.s32 %s17, %s29
    %s122 = ssub.s32 %s18, %s25
    %s123 = sor.u32 %s121, %s122
    %p124 = scmp.eq.s32.totalorder %s123, 0
    %s126 = sadd.s32 %s125, 1
    %s127 = scalar_select %p124, %s125, %s126
    %p130 = pneg %p124
    %p131 = scmp.eq.s32.totalorder %s10, 3
    %p132 = por %p130, %p131
    %p133 = scmp.ne.s32.totalorder %s125, %s128
    %p134 = scmp.eq.s32.totalorder %s10, 0
    %p135 = por %p133, %p134
    %p136 = scmp.ne.s32.totalorder %s125, %s128
    %p137 = scmp.eq.s32.totalorder %s15, 3
    %p138 = por %p136, %p137
    %p139 = scmp.ne.s32.totalorder %s128, %s129
    %p140 = scmp.eq.s32.totalorder %s15, 0
    %p141 = por %p139, %p140
    %p142 = scmp.ne.s32.totalorder %s128, %s129
    %p143 = scmp.eq.s32.totalorder %s16, 3
    %p144 = por %p142, %p143
    %p146 = scmp.ne.s32.totalorder %s129, %s145
    %p147 = scmp.eq.s32.totalorder %s16, 0
    %p148 = por %p146, %p147
    %p149 = scmp.le.s32.totalorder 1, %s10
    %p150 = scmp.lt.s32.totalorder %s10, 5
    %p151 = pnand %p149, %p150
    %p152 = pneg %p151
    // Predicated region
    $region9: #{decoder_block_forward.2} parent=5 // pred_check
      _
    $region10: #{decoder_block_forward.2} parent=5 // pred_check_branch
      %154 = sbr.rel (%p151) target = $region12
    $region11: #{decoder_block_forward.2} parent=5 // pred_region
      %s155 = ssub.s32 %s10, 1
      // Predicated region
      $region13: #{decoder_block_forward.2} parent=11 // pred_check
        %p156 = pneg %p71
      $region14: #{decoder_block_forward.2} parent=11 // pred_check_branch
        %158 = sbr.rel (%p156) target = $region16
      $region15: #{decoder_block_forward.2} parent=11 // pred_region
        _
      $region16: #{decoder_block_forward.2} parent=11 // pred_fallthru
        _
      // Predicated region
      $region17: #{decoder_block_forward.2} parent=11 // pred_check
        %p159 = pneg %p92
      $region18: #{decoder_block_forward.2} parent=11 // pred_check_branch
        %161 = sbr.rel (%p159) target = $region20
      $region19: #{decoder_block_forward.2} parent=11 // pred_region
        _
      $region20: #{decoder_block_forward.2} parent=11 // pred_fallthru
        _
      // Predicated region
      $region21: #{decoder_block_forward.2} parent=11 // pred_check
        %p162 = pneg %p113
      $region22: #{decoder_block_forward.2} parent=11 // pred_check_branch
        %164 = sbr.rel (%p162) target = $region24
      $region23: #{decoder_block_forward.2} parent=11 // pred_region
        _
      $region24: #{decoder_block_forward.2} parent=11 // pred_fallthru
        _
    $region12: #{decoder_block_forward.2} parent=5 // pred_fallthru
      _
    %p165 = scmp.lt.s32.totalorder %s10, 4
    // Predicated region
    $region25: #{decoder_block_forward.2} parent=5 // pred_check
      %p166 = pneg %p165
    $region26: #{decoder_block_forward.2} parent=5 // pred_check_branch
      %168 = sbr.rel (%p166) target = $region28
    $region27: #{decoder_block_forward.2} parent=5 // pred_region
      // Predicated region
      $region29: #{decoder_block_forward.2} parent=27 // pred_check
        %p169 = pneg %p44
      $region30: #{decoder_block_forward.2} parent=27 // pred_check_branch
        %171 = sbr.rel (%p169) target = $region32
      $region31: #{decoder_block_forward.2} parent=27 // pred_region
        %p172 = scmp.lt.s32.totalorder %s17, 1
        %s173 = scalar_select %p172, %s17, 1
        %p174 = scmp.lt.s32.totalorder %s18, 1
        %s175 = scalar_select %p174, %s18, 1
        %s176 = smul.addr %s175, 30
        %s177 = smul.addr %s173, 60
        %s178 = sadd.s32 %s176, %s177
        %s179 = smul.addr %s178, 8
        %s180 = scalar_lea.vmem %s0, %s179
      $region32: #{decoder_block_forward.2} parent=27 // pred_fallthru
        _
    $region28: #{decoder_block_forward.2} parent=5 // pred_fallthru
      _
    %p181 = scmp.le.s32.totalorder 1, %s10
    %p182 = scmp.lt.s32.totalorder %s10, 5
    %p183 = pnand %p181, %p182
    %p184 = pneg %p183
    // Predicated region
    $region33: #{decoder_block_forward.2} parent=5 // pred_check
      _
    $region34: #{decoder_block_forward.2} parent=5 // pred_check_branch
      %186 = sbr.rel (%p183) target = $region36
    $region35: #{decoder_block_forward.2} parent=5 // pred_region
      %s187 = ssub.s32 %s10, 1
      %p188 = scmp.lt.s32.totalorder %s19, 1
      %s189 = scalar_select %p188, %s19, 1
      %p190 = scmp.lt.s32.totalorder %s20, 1
      %s191 = scalar_select %p190, %s20, 1
      %s192 = smul.addr %s191, 30
      %s193 = smul.addr %s189, 60
      %s194 = sadd.s32 %s192, %s193
      %s195 = smul.addr %s194, 8
      %s196 = scalar_lea.vmem %s0, %s195
      %p197 = pneg %p50
      %p198 = pneg %p47
      %p199 = pneg %p71
      %p200 = pneg %p68
      %p201 = pneg %p92
      %p202 = pneg %p89
      %p203 = pneg %p113
      %p204 = pneg %p110
      %p205 = pneg %p141
      %p206 = pneg %p138
      %s207 = smul.u32 8, %s20
      %p208 = scmp.lt.s32.totalorder %s19, 1
      %s209 = scalar_select %p208, %s19, 1
      %p210 = scmp.lt.s32.totalorder %s207, 15
      %s211 = scalar_select %p210, %s207, 15
      %s212 = smul.addr %s211, 2
      %s213 = smul.addr %s209, 32
      %s214 = sadd.s32 %s212, %s213
      %s215 = smul.addr %s214, 8
      %s216 = scalar_lea.vmem %s4, %s215
      %p217 = scmp.lt.s32.totalorder %s19, 1
      %s218 = scalar_select %p217, %s19, 1
      %p219 = scmp.lt.s32.totalorder %s20, 1
      %s220 = scalar_select %p219, %s20, 1
      %s221 = smul.addr %s220, 30
      %s222 = smul.addr %s218, 60
      %s223 = sadd.s32 %s221, %s222
      %s224 = smul.addr %s223, 8
      %s225 = scalar_lea.vmem %s0, %s224
      %s226 = smul.u32 8, %s20
      %p227 = scmp.lt.s32.totalorder %s19, 1
      %s228 = scalar_select %p227, %s19, 1
      %p229 = scmp.lt.s32.totalorder %s226, 15
      %s230 = scalar_select %p229, %s226, 15
      %s231 = smul.addr %s230, 2
      %s232 = smul.addr %s228, 32
      %s233 = sadd.s32 %s231, %s232
      %s234 = smul.addr %s233, 8
      %s235 = scalar_lea.vmem %s4, %s234
      %s236 = smul.u32 8, %s20
      %v237 = vld [vmem:[%s225] sm:$0xff]
      %v238 = vld [vmem:[%s225 + $0x8] sm:$0xff]
      %v239 = vld [vmem:[%s225 + $0x18] sm:$0xff]
      %v240 = vld [vmem:[%s225 + $0x20] sm:$0xff]
      %v241 = vld [vmem:[%s225 + $0x30] sm:$0xff]
      %v242 = vld [vmem:[%s225 + $0x38] sm:$0xff]
      %v243 = vld [vmem:[%s225 + $0x48] sm:$0xff]
      %v244 = vld [vmem:[%s225 + $0x50] sm:$0xff]
      %v245 = vld [vmem:[%s225 + $0x60] sm:$0xff]
      %v246 = vld [vmem:[%s225 + $0x68] sm:$0xff]
      %v247 = vld [vmem:[%s225 + $0x78] sm:$0xff]
      %v248 = vld [vmem:[%s225 + $0x80] sm:$0xff]
      %v249 = vld [vmem:[%s225 + $0x90] sm:$0xff]
      %v250 = vld [vmem:[%s225 + $0x98] sm:$0xff]
      %v251 = vld [vmem:[%s225 + $0xa8] sm:$0xff]
      %v252 = vld [vmem:[%s225 + $0xb0] sm:$0xff]
      %v253 = vld [vmem:[%s1] sm:$0xff]
      %v254 = vld [vmem:[%s225 + $0x1] sm:$0xff]
      %v255 = vld [vmem:[%s225 + $0x9] sm:$0xff]
      %v256 = vld [vmem:[%s225 + $0x19] sm:$0xff]
      %v257 = vld [vmem:[%s225 + $0x21] sm:$0xff]
      %v258 = vld [vmem:[%s225 + $0x31] sm:$0xff]
      %v259 = vld [vmem:[%s225 + $0x39] sm:$0xff]
      %v260 = vld [vmem:[%s225 + $0x49] sm:$0xff]
      %v261 = vld [vmem:[%s225 + $0x51] sm:$0xff]
      %v262 = vld [vmem:[%s225 + $0x61] sm:$0xff]
      %v263 = vld [vmem:[%s225 + $0x69] sm:$0xff]
      %v264 = vld [vmem:[%s225 + $0x79] sm:$0xff]
      %v265 = vld [vmem:[%s225 + $0x81] sm:$0xff]
      %v266 = vld [vmem:[%s225 + $0x91] sm:$0xff]
      %v267 = vld [vmem:[%s225 + $0x99] sm:$0xff]
      %v268 = vld [vmem:[%s225 + $0xa9] sm:$0xff]
      %v269 = vld [vmem:[%s225 + $0xb1] sm:$0xff]
      %s270 = scalar_lea.vmem %s1, 8
      %v271 = vld [vmem:[%s270] sm:$0xff]
      %vm272 = vcmask 64512
      %v274 = vsel %vm272, %v254, 0
      %v277 = vsel %vm272, %v255, 0
      %v280 = vsel %vm272, %v256, 0
      %v283 = vsel %vm272, %v257, 0
      %v286 = vsel %vm272, %v258, 0
      %v289 = vsel %vm272, %v259, 0
      %v292 = vsel %vm272, %v260, 0
      %v295 = vsel %vm272, %v261, 0
      %v298 = vsel %vm272, %v262, 0
      %v301 = vsel %vm272, %v263, 0
      %v304 = vsel %vm272, %v264, 0
      %v307 = vsel %vm272, %v265, 0
      %v310 = vsel %vm272, %v266, 0
      %v313 = vsel %vm272, %v267, 0
      %v316 = vsel %vm272, %v268, 0
      %v319 = vsel %vm272, %v269, 0
      %321 = vmatprep.subr.mxu0 0.0
      %322 = vmatpush1.msra.mxu0 %v271
      %323 = vmatprep.subr.mxu0 0.0
      %324 = vmatpush1.msra.mxu0 0.0
      %325 = vmatprep.subr.mxu0 0.0
      %326 = vmatpush1.msra.mxu0 0.0
      %327 = vmatprep.subr.mxu0 0.0
      %328 = vmatpush1.msra.mxu0 0.0
      %329 = vmatprep.subr.mxu0 0.0
      %330 = vmatpush1.msra.mxu0 0.0
      %331 = vmatprep.subr.mxu0 0.0
      %332 = vmatpush1.msra.mxu0 0.0
      %333 = vmatprep.subr.mxu0 0.0
      %334 = vmatpush1.msra.mxu0 0.0
      %335 = vmatprep.subr.mxu0 0.0
      %336 = vmatpush1.msra.mxu0 0.0
      %337 = vmatprep.subr.mxu0 0.0
      %338 = vmatpush1.msra.mxu0 0.0
      %339 = vmatprep.subr.mxu0 0.0
      %340 = vmatpush1.msra.mxu0 0.0
      %341 = vmatprep.subr.mxu0 0.0
      %342 = vmatpush1.msra.mxu0 0.0
      %343 = vmatprep.subr.mxu0 0.0
      %344 = vmatpush1.msra.mxu0 0.0
      %345 = vmatprep.subr.mxu0 0.0
      %346 = vmatpush1.msra.mxu0 0.0
      %347 = vmatprep.subr.mxu0 0.0
      %348 = vmatpush1.msra.mxu0 0.0
      %349 = vmatprep.subr.mxu0 0.0
      %350 = vmatpush1.msra.mxu0 0.0
      %351 = vmatprep.subr.mxu0 0.0
      %352 = vmatpush1.msra.mxu0 0.0
      %353 = vmatprep.subr.mxu0 0.0
      %354 = vmatpush1.msra.mxu0 0.0
      %355 = vmatprep.subr.mxu0 0.0
      %356 = vmatpush1.msra.mxu0 0.0
      %357 = vmatprep.subr.mxu0 0.0
      %358 = vmatpush1.msra.mxu0 0.0
      %359 = vmatprep.subr.mxu0 0.0
      %360 = vmatpush1.msra.mxu0 0.0
      %361 = vmatprep.subr.mxu0 0.0
      %362 = vmatpush1.msra.mxu0 0.0
      %363 = vmatprep.subr.mxu0 0.0
      %364 = vmatpush1.msra.mxu0 0.0
      %365 = vmatprep.subr.mxu0 0.0
      %366 = vmatpush1.msra.mxu0 0.0
      %367 = vmatprep.subr.mxu0 0.0
      %368 = vmatpush1.msra.mxu0 0.0
      %369 = vmatprep.subr.mxu0 0.0
      %370 = vmatpush1.msra.mxu0 0.0
      %371 = vmatprep.subr.mxu0 0.0
      %372 = vmatpush1.msra.mxu0 0.0
      %373 = vmatprep.subr.mxu0 0.0
      %374 = vmatpush1.msra.mxu0 0.0
      %375 = vmatprep.subr.mxu0 0.0
      %376 = vmatpush1.msra.mxu0 0.0
      %377 = vmatprep.subr.mxu0 0.0
      %378 = vmatpush1.msra.mxu0 0.0
      %379 = vmatprep.subr.mxu0 0.0
      %380 = vmatpush1.msra.mxu0 0.0
      %381 = vmatprep.subr.mxu0 0.0
      %382 = vmatpush1.msra.mxu0 0.0
      %383 = vmatprep.subr.mxu0 0.0
      %384 = vmatpush1.msra.mxu0 0.0
      %385 = vmatprep.mubr.f32.mxu0 0.0
      %386 = vmatmul.mubr.f32.gmra.mrb[0].mxu0 %v274
      %v387 = vpop.f32.mrb[0].mxu0
      %v388 = vadd.f32 0.0, %v387
      %v389 = vpop.f32.mrb[0].mxu0
      %390 = vmatprep.mubr.f32.mxu0 0.0
      %391 = vmatmul.mubr.f32.gmra.mrb[0].mxu0 %v277
      %v392 = vpop.f32.mrb[0].mxu0
      %v393 = vadd.f32 0.0, %v392
      %v394 = vpop.f32.mrb[0].mxu0
      %395 = vmatprep.mubr.f32.mxu0 0.0
      %396 = vmatmul.mubr.f32.gmra.mrb[0].mxu0 %v280
      %v397 = vpop.f32.mrb[0].mxu0
      %v398 = vadd.f32 0.0, %v397
      %v399 = vpop.f32.mrb[0].mxu0
      %400 = vmatprep.mubr.f32.mxu0 0.0
      %401 = vmatmul.mubr.f32.gmra.mrb[0].mxu0 %v283
      %v402 = vpop.f32.mrb[0].mxu0
      %v403 = vadd.f32 0.0, %v402
      %v404 = vpop.f32.mrb[0].mxu0
      %405 = vmatprep.mubr.f32.mxu0 0.0
      %406 = vmatmul.mubr.f32.gmra.mrb[0].mxu0 %v286
      %v407 = vpop.f32.mrb[0].mxu0
      %v408 = vadd.f32 0.0, %v407
      %v409 = vpop.f32.mrb[0].mxu0
      %410 = vmatprep.mubr.f32.mxu0 0.0
      %411 = vmatmul.mubr.f32.gmra.mrb[0].mxu0 %v289
      %v412 = vpop.f32.mrb[0].mxu0
      %v413 = vadd.f32 0.0, %v412
      %v414 = vpop.f32.mrb[0].mxu0
      %415 = vmatprep.mubr.f32.mxu0 0.0
      %416 = vmatmul.mubr.f32.gmra.mrb[0].mxu0 %v292
      %v417 = vpop.f32.mrb[0].mxu0
      %v418 = vadd.f32 0.0, %v417
      %v419 = vpop.f32.mrb[0].mxu0
      %420 = vmatprep.mubr.f32.mxu0 0.0
      %421 = vmatmul.mubr.f32.gmra.mrb[0].mxu0 %v295
      %v422 = vpop.f32.mrb[0].mxu0
      %v423 = vadd.f32 0.0, %v422
      %v424 = vpop.f32.mrb[0].mxu0
      %425 = vmatprep.mubr.f32.mxu0 0.0
      %426 = vmatmul.mubr.f32.gmra.mrb[0].mxu0 %v298
      %v427 = vpop.f32.mrb[0].mxu0
      %v428 = vadd.f32 0.0, %v427
      %v429 = vpop.f32.mrb[0].mxu0
      %430 = vmatprep.mubr.f32.mxu0 0.0
      %431 = vmatmul.mubr.f32.gmra.mrb[0].mxu0 %v301
      %v432 = vpop.f32.mrb[0].mxu0
      %v433 = vadd.f32 0.0, %v432
      %v434 = vpop.f32.mrb[0].mxu0
      %435 = vmatprep.mubr.f32.mxu0 0.0
      %436 = vmatmul.mubr.f32.gmra.mrb[0].mxu0 %v304
      %v437 = vpop.f32.mrb[0].mxu0
      %v438 = vadd.f32 0.0, %v437
      %v439 = vpop.f32.mrb[0].mxu0
      %440 = vmatprep.mubr.f32.mxu0 0.0
      %441 = vmatmul.mubr.f32.gmra.mrb[0].mxu0 %v307
      %v442 = vpop.f32.mrb[0].mxu0
      %v443 = vadd.f32 0.0, %v442
      %v444 = vpop.f32.mrb[0].mxu0
      %445 = vmatprep.mubr.f32.mxu0 0.0
      %446 = vmatmul.mubr.f32.gmra.mrb[0].mxu0 %v310
      %v447 = vpop.f32.mrb[0].mxu0
      %v448 = vadd.f32 0.0, %v447
      %v449 = vpop.f32.mrb[0].mxu0
      %450 = vmatprep.mubr.f32.mxu0 0.0
      %451 = vmatmul.mubr.f32.gmra.mrb[0].mxu0 %v313
      %v452 = vpop.f32.mrb[0].mxu0
      %v453 = vadd.f32 0.0, %v452
      %v454 = vpop.f32.mrb[0].mxu0
      %455 = vmatprep.mubr.f32.mxu0 0.0
      %456 = vmatmul.mubr.f32.gmra.mrb[0].mxu0 %v316
      %v457 = vpop.f32.mrb[0].mxu0
      %v458 = vadd.f32 0.0, %v457
      %v459 = vpop.f32.mrb[0].mxu0
      %460 = vmatprep.mubr.f32.mxu0 0.0
      %461 = vmatmul.mubr.f32.gmra.mrb[0].mxu0 %v319
      %v462 = vpop.f32.mrb[0].mxu0
      %v463 = vadd.f32 0.0, %v462
      %v464 = vpop.f32.mrb[0].mxu0
      %465 = vdwg.mxu0
      %v467 = vsel %vm272, %v237, 0
      %v470 = vsel %vm272, %v238, 0
      %v473 = vsel %vm272, %v239, 0
      %v476 = vsel %vm272, %v240, 0
      %v479 = vsel %vm272, %v241, 0
      %v482 = vsel %vm272, %v242, 0
      %v485 = vsel %vm272, %v243, 0
      %v488 = vsel %vm272, %v244, 0
      %v491 = vsel %vm272, %v245, 0
      %v494 = vsel %vm272, %v246, 0
      %v497 = vsel %vm272, %v247, 0
      %v500 = vsel %vm272, %v248, 0
      %v503 = vsel %vm272, %v249, 0
      %v506 = vsel %vm272, %v250, 0
      %v509 = vsel %vm272, %v251, 0
      %v512 = vsel %vm272, %v252, 0
      %514 = vmatprep.subr.mxu0 0.0
      %515 = vmatpush1.msra.mxu0 %v253
      %516 = vmatprep.subr.mxu0 0.0
      %517 = vmatpush1.msra.mxu0 0.0
      %518 = vmatprep.subr.mxu0 0.0
      %519 = vmatpush1.msra.mxu0 0.0
      %520 = vmatprep.subr.mxu0 0.0
      %521 = vmatpush1.msra.mxu0 0.0
      %522 = vmatprep.subr.mxu0 0.0
      %523 = vmatpush1.msra.mxu0 0.0
      %524 = vmatprep.subr.mxu0 0.0
      %525 = vmatpush1.msra.mxu0 0.0
      %526 = vmatprep.subr.mxu0 0.0
      %527 = vmatpush1.msra.mxu0 0.0
      %528 = vmatprep.subr.mxu0 0.0
      %529 = vmatpush1.msra.mxu0 0.0
      %530 = vmatprep.subr.mxu0 0.0
      %531 = vmatpush1.msra.mxu0 0.0
      %532 = vmatprep.subr.mxu0 0.0
      %533 = vmatpush1.msra.mxu0 0.0
      %534 = vmatprep.subr.mxu0 0.0
      %535 = vmatpush1.msra.mxu0 0.0
      %536 = vmatprep.subr.mxu0 0.0
      %537 = vmatpush1.msra.mxu0 0.0
      %538 = vmatprep.subr.mxu0 0.0
      %539 = vmatpush1.msra.mxu0 0.0
      %540 = vmatprep.subr.mxu0 0.0
      %541 = vmatpush1.msra.mxu0 0.0
      %542 = vmatprep.subr.mxu0 0.0
      %543 = vmatpush1.msra.mxu0 0.0
      %544 = vmatprep.subr.mxu0 0.0
      %545 = vmatpush1.msra.mxu0 0.0
      %546 = vmatprep.subr.mxu0 0.0
      %547 = vmatpush1.msra.mxu0 0.0
      %548 = vmatprep.subr.mxu0 0.0
      %549 = vmatpush1.msra.mxu0 0.0
      %550 = vmatprep.subr.mxu0 0.0
      %551 = vmatpush1.msra.mxu0 0.0
      %552 = vmatprep.subr.mxu0 0.0
      %553 = vmatpush1.msra.mxu0 0.0
      %554 = vmatprep.subr.mxu0 0.0
      %555 = vmatpush1.msra.mxu0 0.0
      %556 = vmatprep.subr.mxu0 0.0
      %557 = vmatpush1.msra.mxu0 0.0
      %558 = vmatprep.subr.mxu0 0.0
      %559 = vmatpush1.msra.mxu0 0.0
      %560 = vmatprep.subr.mxu0 0.0
      %561 = vmatpush1.msra.mxu0 0.0
      %562 = vmatprep.subr.mxu0 0.0
      %563 = vmatpush1.msra.mxu0 0.0
      %564 = vmatprep.subr.mxu0 0.0
      %565 = vmatpush1.msra.mxu0 0.0
      %566 = vmatprep.subr.mxu0 0.0
      %567 = vmatpush1.msra.mxu0 0.0
      %568 = vmatprep.subr.mxu0 0.0
      %569 = vmatpush1.msra.mxu0 0.0
      %570 = vmatprep.subr.mxu0 0.0
      %571 = vmatpush1.msra.mxu0 0.0
      %572 = vmatprep.subr.mxu0 0.0
      %573 = vmatpush1.msra.mxu0 0.0
      %574 = vmatprep.subr.mxu0 0.0
      %575 = vmatpush1.msra.mxu0 0.0
      %576 = vmatprep.subr.mxu0 0.0
      %577 = vmatpush1.msra.mxu0 0.0
      %578 = vmatprep.mubr.f32.mxu0 0.0
      %579 = vmatmul.mubr.f32.gmra.mrb[0].mxu0 %v467
      %v580 = vpop.f32.mrb[0].mxu0
      %v581 = vadd.f32 %v388, %v580
      %v582 = vpop.f32.mrb[0].mxu0
      %583 = vmatprep.mubr.f32.mxu0 0.0
      %584 = vmatmul.mubr.f32.gmra.mrb[0].mxu0 %v470
      %v585 = vpop.f32.mrb[0].mxu0
      %v586 = vadd.f32 %v393, %v585
      %v587 = vpop.f32.mrb[0].mxu0
      %588 = vmatprep.mubr.f32.mxu0 0.0
      %589 = vmatmul.mubr.f32.gmra.mrb[0].mxu0 %v473
      %v590 = vpop.f32.mrb[0].mxu0
      %v591 = vadd.f32 %v398, %v590
      %v592 = vpop.f32.mrb[0].mxu0
      %593 = vmatprep.mubr.f32.mxu0 0.0
      %594 = vmatmul.mubr.f32.gmra.mrb[0].mxu0 %v476
      %v595 = vpop.f32.mrb[0].mxu0
      %v596 = vadd.f32 %v403, %v595
      %v597 = vpop.f32.mrb[0].mxu0
      %598 = vmatprep.mubr.f32.mxu0 0.0
      %599 = vmatmul.mubr.f32.gmra.mrb[0].mxu0 %v479
      %v600 = vpop.f32.mrb[0].mxu0
      %v601 = vadd.f32 %v408, %v600
      %v602 = vpop.f32.mrb[0].mxu0
      %603 = vmatprep.mubr.f32.mxu0 0.0
      %604 = vmatmul.mubr.f32.gmra.mrb[0].mxu0 %v482
      %v605 = vpop.f32.mrb[0].mxu0
      %v606 = vadd.f32 %v413, %v605
      %v607 = vpop.f32.mrb[0].mxu0
      %608 = vmatprep.mubr.f32.mxu0 0.0
      %609 = vmatmul.mubr.f32.gmra.mrb[0].mxu0 %v485
      %v610 = vpop.f32.mrb[0].mxu0
      %v611 = vadd.f32 %v418, %v610
      %v612 = vpop.f32.mrb[0].mxu0
      %613 = vmatprep.mubr.f32.mxu0 0.0
      %614 = vmatmul.mubr.f32.gmra.mrb[0].mxu0 %v488
      %v615 = vpop.f32.mrb[0].mxu0
      %v616 = vadd.f32 %v423, %v615
      %v617 = vpop.f32.mrb[0].mxu0
      %618 = vmatprep.mubr.f32.mxu0 0.0
      %619 = vmatmul.mubr.f32.gmra.mrb[0].mxu0 %v491
      %v620 = vpop.f32.mrb[0].mxu0
      %v621 = vadd.f32 %v428, %v620
      %v622 = vpop.f32.mrb[0].mxu0
      %623 = vmatprep.mubr.f32.mxu0 0.0
      %624 = vmatmul.mubr.f32.gmra.mrb[0].mxu0 %v494
      %v625 = vpop.f32.mrb[0].mxu0
      %v626 = vadd.f32 %v433, %v625
      %v627 = vpop.f32.mrb[0].mxu0
      %628 = vmatprep.mubr.f32.mxu0 0.0
      %629 = vmatmul.mubr.f32.gmra.mrb[0].mxu0 %v497
      %v630 = vpop.f32.mrb[0].mxu0
      %v631 = vadd.f32 %v438, %v630
      %v632 = vpop.f32.mrb[0].mxu0
      %633 = vmatprep.mubr.f32.mxu0 0.0
      %634 = vmatmul.mubr.f32.gmra.mrb[0].mxu0 %v500
      %v635 = vpop.f32.mrb[0].mxu0
      %v636 = vadd.f32 %v443, %v635
      %v637 = vpop.f32.mrb[0].mxu0
      %638 = vmatprep.mubr.f32.mxu0 0.0
      %639 = vmatmul.mubr.f32.gmra.mrb[0].mxu0 %v503
      %v640 = vpop.f32.mrb[0].mxu0
      %v641 = vadd.f32 %v448, %v640
      %v642 = vpop.f32.mrb[0].mxu0
      %643 = vmatprep.mubr.f32.mxu0 0.0
      %644 = vmatmul.mubr.f32.gmra.mrb[0].mxu0 %v506
      %v645 = vpop.f32.mrb[0].mxu0
      %v646 = vadd.f32 %v453, %v645
      %v647 = vpop.f32.mrb[0].mxu0
      %648 = vmatprep.mubr.f32.mxu0 0.0
      %649 = vmatmul.mubr.f32.gmra.mrb[0].mxu0 %v509
      %v650 = vpop.f32.mrb[0].mxu0
      %v651 = vadd.f32 %v458, %v650
      %v652 = vpop.f32.mrb[0].mxu0
      %653 = vmatprep.mubr.f32.mxu0 0.0
      %654 = vmatmul.mubr.f32.gmra.mrb[0].mxu0 %v512
      %v655 = vpop.f32.mrb[0].mxu0
      %v656 = vadd.f32 %v463, %v655
      %v657 = vpop.f32.mrb[0].mxu0
      %658 = vdwg.mxu0
      %v659 = vld [vmem:[%s225 + $0x2] sm:$0xff]
      %v660 = vld [vmem:[%s225 + $0xa] sm:$0xff]
      %v661 = vld [vmem:[%s225 + $0x1a] sm:$0xff]
      %v662 = vld [vmem:[%s225 + $0x22] sm:$0xff]
      %v663 = vld [vmem:[%s225 + $0x32] sm:$0xff]
      %v664 = vld [vmem:[%s225 + $0x3a] sm:$0xff]
      %v665 = vld [vmem:[%s225 + $0x4a] sm:$0xff]
      %v666 = vld [vmem:[%s225 + $0x52] sm:$0xff]
      %v667 = vld [vmem:[%s225 + $0x62] sm:$0xff]
      %v668 = vld [vmem:[%s225 + $0x6a] sm:$0xff]
      %v669 = vld [vmem:[%s225 + $0x7a] sm:$0xff]
      %v670 = vld [vmem:[%s225 + $0x82] sm:$0xff]
      %v671 = vld [vmem:[%s225 + $0x92] sm:$0xff]
      %v672 = vld [vmem:[%s225 + $0x9a] sm:$0xff]
      %v673 = vld [vmem:[%s225 + $0xaa] sm:$0xff]
      %v674 = vld [vmem:[%s225 + $0xb2] sm:$0xff]
      %s675 = scalar_lea.vmem %s1, 16
      %v676 = vld [vmem:[%s675] sm:$0xff]
      %v678 = vsel %vm272, %v659, 0
      %v681 = vsel %vm272, %v660, 0
      %v684 = vsel %vm272, %v661, 0
      %v687 = vsel %vm272, %v662, 0
      %v690 = vsel %vm272, %v663, 0
      %v693 = vsel %vm272, %v664, 0
      %v696 = vsel %vm272, %v665, 0
      %v699 = vsel %vm272, %v666, 0
      %v702 = vsel %vm272, %v667, 0
      %v705 = vsel %vm272, %v668, 0
      %v708 = vsel %vm272, %v669, 0
      %v711 = vsel %vm272, %v670, 0
      %v714 = vsel %vm272, %v671, 0
      %v717 = vsel %vm272, %v672, 0
      %v720 = vsel %vm272, %v673, 0
      %v723 = vsel %vm272, %v674, 0
      %725 = vmatprep.subr.mxu0 0.0
      %726 = vmatpush1.msra.mxu0 %v676
      %727 = vmatprep.subr.mxu0 0.0
      %728 = vmatpush1.msra.mxu0 0.0
      %729 = vmatprep.subr.mxu0 0.0
      %730 = vmatpush1.msra.mxu0 0.0
      %731 = vmatprep.subr.mxu0 0.0
      %732 = vmatpush1.msra.mxu0 0.0
      %733 = vmatprep.subr.mxu0 0.0
      %734 = vmatpush1.msra.mxu0 0.0
      %735 = vmatprep.subr.mxu0 0.0
      %736 = vmatpush1.msra.mxu0 0.0
      %737 = vmatprep.subr.mxu0 0.0
      %738 = vmatpush1.msra.mxu0 0.0
      %739 = vmatprep.subr.mxu0 0.0
      %740 = vmatpush1.msra.mxu0 0.0
      %741 = vmatprep.subr.mxu0 0.0
      %742 = vmatpush1.msra.mxu0 0.0
      %743 = vmatprep.subr.mxu0 0.0
      %744 = vmatpush1.msra.mxu0 0.0
      %745 = vmatprep.subr.mxu0 0.0
      %746 = vmatpush1.msra.mxu0 0.0
      %747 = vmatprep.subr.mxu0 0.0
      %748 = vmatpush1.msra.mxu0 0.0
      %749 = vmatprep.subr.mxu0 0.0
      %750 = vmatpush1.msra.mxu0 0.0
      %751 = vmatprep.subr.mxu0 0.0
      %752 = vmatpush1.msra.mxu0 0.0
      %753 = vmatprep.subr.mxu0 0.0
      %754 = vmatpush1.msra.mxu0 0.0
      %755 = vmatprep.subr.mxu0 0.0
      %756 = vmatpush1.msra.mxu0 0.0
      %757 = vmatprep.subr.mxu0 0.0
      %758 = vmatpush1.msra.mxu0 0.0
      %759 = vmatprep.subr.mxu0 0.0
      %760 = vmatpush1.msra.mxu0 0.0
      %761 = vmatprep.subr.mxu0 0.0
      %762 = vmatpush1.msra.mxu0 0.0
      %763 = vmatprep.subr.mxu0 0.0
      %764 = vmatpush1.msra.mxu0 0.0
      %765 = vmatprep.subr.mxu0 0.0
      %766 = vmatpush1.msra.mxu0 0.0
      %767 = vmatprep.subr.mxu0 0.0
      %768 = vmatpush1.msra.mxu0 0.0
      %769 = vmatprep.subr.mxu0 0.0
      %770 = vmatpush1.msra.mxu0 0.0
      %771 = vmatprep.subr.mxu0 0.0
      %772 = vmatpush1.msra.mxu0 0.0
      %773 = vmatprep.subr.mxu0 0.0
      %774 = vmatpush1.msra.mxu0 0.0
      %775 = vmatprep.subr.mxu0 0.0
      %776 = vmatpush1.msra.mxu0 0.0
      %777 = vmatprep.subr.mxu0 0.0
      %778 = vmatpush1.msra.mxu0 0.0
      %779 = vmatprep.subr.mxu0 0.0
      %780 = vmatpush1.msra.mxu0 0.0
      %781 = vmatprep.subr.mxu0 0.0
      %782 = vmatpush1.msra.mxu0 0.0
      %783 = vmatprep.subr.mxu0 0.0
      %784 = vmatpush1.msra.mxu0 0.0
      %785 = vmatprep.subr.mxu0 0.0
      %786 = vmatpush1.msra.mxu0 0.0
      %787 = vmatprep.subr.mxu0 0.0
      %788 = vmatpush1.msra.mxu0 0.0
      %789 = vmatprep.mubr.f32.mxu0 0.0
      %790 = vmatmul.mubr.f32.gmra.mrb[0].mxu0 %v678
      %v791 = vpop.f32.mrb[0].mxu0
      %v792 = vadd.f32 0.0, %v791
      %v793 = vpop.f32.mrb[0].mxu0
      %794 = vmatprep.mubr.f32.mxu0 0.0
      %795 = vmatmul.mubr.f32.gmra.mrb[0].mxu0 %v681
      %v796 = vpop.f32.mrb[0].mxu0
      %v797 = vadd.f32 0.0, %v796
      %v798 = vpop.f32.mrb[0].mxu0
      %799 = vmatprep.mubr.f32.mxu0 0.0
      %800 = vmatmul.mubr.f32.gmra.mrb[0].mxu0 %v684
      %v801 = vpop.f32.mrb[0].mxu0
      %v802 = vadd.f32 0.0, %v801
      %v803 = vpop.f32.mrb[0].mxu0
      %804 = vmatprep.mubr.f32.mxu0 0.0
      %805 = vmatmul.mubr.f32.gmra.mrb[0].mxu0 %v687
      %v806 = vpop.f32.mrb[0].mxu0
      %v807 = vadd.f32 0.0, %v806
      %v808 = vpop.f32.mrb[0].mxu0
      %809 = vmatprep.mubr.f32.mxu0 0.0
      %810 = vmatmul.mubr.f32.gmra.mrb[0].mxu0 %v690
      %v811 = vpop.f32.mrb[0].mxu0
      %v812 = vadd.f32 0.0, %v811
      %v813 = vpop.f32.mrb[0].mxu0
      %814 = vmatprep.mubr.f32.mxu0 0.0
      %815 = vmatmul.mubr.f32.gmra.mrb[0].mxu0 %v693
      %v816 = vpop.f32.mrb[0].mxu0
      %v817 = vadd.f32 0.0, %v816
      %v818 = vpop.f32.mrb[0].mxu0
      %819 = vmatprep.mubr.f32.mxu0 0.0
      %820 = vmatmul.mubr.f32.gmra.mrb[0].mxu0 %v696
      %v821 = vpop.f32.mrb[0].mxu0
      %v822 = vadd.f32 0.0, %v821
      %v823 = vpop.f32.mrb[0].mxu0
      %824 = vmatprep.mubr.f32.mxu0 0.0
      %825 = vmatmul.mubr.f32.gmra.mrb[0].mxu0 %v699
      %v826 = vpop.f32.mrb[0].mxu0
      %v827 = vadd.f32 0.0, %v826
      %v828 = vpop.f32.mrb[0].mxu0
      %829 = vmatprep.mubr.f32.mxu0 0.0
      %830 = vmatmul.mubr.f32.gmra.mrb[0].mxu0 %v702
      %v831 = vpop.f32.mrb[0].mxu0
      %v832 = vadd.f32 0.0, %v831
      %v833 = vpop.f32.mrb[0].mxu0
      %834 = vmatprep.mubr.f32.mxu0 0.0
      %835 = vmatmul.mubr.f32.gmra.mrb[0].mxu0 %v705
      %v836 = vpop.f32.mrb[0].mxu0
      %v837 = vadd.f32 0.0, %v836
      %v838 = vpop.f32.mrb[0].mxu0
      %839 = vmatprep.mubr.f32.mxu0 0.0
      %840 = vmatmul.mubr.f32.gmra.mrb[0].mxu0 %v708
      %v841 = vpop.f32.mrb[0].mxu0
      %v842 = vadd.f32 0.0, %v841
      %v843 = vpop.f32.mrb[0].mxu0
      %844 = vmatprep.mubr.f32.mxu0 0.0
      %845 = vmatmul.mubr.f32.gmra.mrb[0].mxu0 %v711
      %v846 = vpop.f32.mrb[0].mxu0
      %v847 = vadd.f32 0.0, %v846
      %v848 = vpop.f32.mrb[0].mxu0
      %849 = vmatprep.mubr.f32.mxu0 0.0
      %850 = vmatmul.mubr.f32.gmra.mrb[0].mxu0 %v714
      %v851 = vpop.f32.mrb[0].mxu0
      %v852 = vadd.f32 0.0, %v851
      %v853 = vpop.f32.mrb[0].mxu0
      %854 = vmatprep.mubr.f32.mxu0 0.0
      %855 = vmatmul.mubr.f32.gmra.mrb[0].mxu0 %v717
      %v856 = vpop.f32.mrb[0].mxu0
      %v857 = vadd.f32 0.0, %v856
      %v858 = vpop.f32.mrb[0].mxu0
      %859 = vmatprep.mubr.f32.mxu0 0.0
      %860 = vmatmul.mubr.f32.gmra.mrb[0].mxu0 %v720
      %v861 = vpop.f32.mrb[0].mxu0
      %v862 = vadd.f32 0.0, %v861
      %v863 = vpop.f32.mrb[0].mxu0
      %864 = vmatprep.mubr.f32.mxu0 0.0
      %865 = vmatmul.mubr.f32.gmra.mrb[0].mxu0 %v723
      %v866 = vpop.f32.mrb[0].mxu0
      %v867 = vadd.f32 0.0, %v866
      %v868 = vpop.f32.mrb[0].mxu0
      %869 = vdwg.mxu0
      %v870 = vadd.f32 %v581, %v792
      %v871 = vadd.f32 %v586, %v797
      %v872 = vadd.f32 %v591, %v802
      %v873 = vadd.f32 %v596, %v807
      %v874 = vadd.f32 %v601, %v812
      %v875 = vadd.f32 %v606, %v817
      %v876 = vadd.f32 %v611, %v822
      %v877 = vadd.f32 %v616, %v827
      %v878 = vadd.f32 %v621, %v832
      %v879 = vadd.f32 %v626, %v837
      %v880 = vadd.f32 %v631, %v842
      %v881 = vadd.f32 %v636, %v847
      %v882 = vadd.f32 %v641, %v852
      %v883 = vadd.f32 %v646, %v857
      %v884 = vadd.f32 %v651, %v862
      %v885 = vadd.f32 %v656, %v867
      %s886 = scalar_lea.vmem %s225, 24
      %v887 = vld [vmem:[%s886] sm:$0xff]
      %v888 = vld [vmem:[%s886 + $0x8] sm:$0xff]
      %v889 = vld [vmem:[%s886 + $0x18] sm:$0xff]
      %v890 = vld [vmem:[%s886 + $0x20] sm:$0xff]
      %v891 = vld [vmem:[%s886 + $0x30] sm:$0xff]
      %v892 = vld [vmem:[%s886 + $0x38] sm:$0xff]
      %v893 = vld [vmem:[%s886 + $0x48] sm:$0xff]
      %v894 = vld [vmem:[%s886 + $0x50] sm:$0xff]
      %v895 = vld [vmem:[%s886 + $0x60] sm:$0xff]
      %v896 = vld [vmem:[%s886 + $0x68] sm:$0xff]
      %v897 = vld [vmem:[%s886 + $0x78] sm:$0xff]
      %v898 = vld [vmem:[%s886 + $0x80] sm:$0xff]
      %v899 = vld [vmem:[%s886 + $0x90] sm:$0xff]
      %v900 = vld [vmem:[%s886 + $0x98] sm:$0xff]
      %v901 = vld [vmem:[%s886 + $0xa8] sm:$0xff]
      %v902 = vld [vmem:[%s886 + $0xb0] sm:$0xff]
      %s903 = scalar_lea.vmem %s1, 24
      %v904 = vld [vmem:[%s903] sm:$0xff]
      %v906 = vsel %vm272, %v887, 0
      %v909 = vsel %vm272, %v888, 0
      %v912 = vsel %vm272, %v889, 0
      %v915 = vsel %vm272, %v890, 0
      %v918 = vsel %vm272, %v891, 0
      %v921 = vsel %vm272, %v892, 0
      %v924 = vsel %vm272, %v893, 0
      %v927 = vsel %vm272, %v894, 0
      %v930 = vsel %vm272, %v895, 0
      %v933 = vsel %vm272, %v896, 0
      %v936 = vsel %vm272, %v897, 0
      %v939 = vsel %vm272, %v898, 0
      %v942 = vsel %vm272, %v899, 0
      %v945 = vsel %vm272, %v900, 0
      %v948 = vsel %vm272, %v901, 0
      %v951 = vsel %vm272, %v902, 0
      %953 = vmatprep.subr.mxu0 0.0
      %954 = vmatpush1.msra.mxu0 %v904
      %955 = vmatprep.subr.mxu0 0.0
      %956 = vmatpush1.msra.mxu0 0.0
      %957 = vmatprep.subr.mxu0 0.0
      %958 = vmatpush1.msra.mxu0 0.0
      %959 = vmatprep.subr.mxu0 0.0
      %960 = vmatpush1.msra.mxu0 0.0
      %961 = vmatprep.subr.mxu0 0.0
      %962 = vmatpush1.msra.mxu0 0.0
      %963 = vmatprep.subr.mxu0 0.0
      %964 = vmatpush1.msra.mxu0 0.0
      %965 = vmatprep.subr.mxu0 0.0
      %966 = vmatpush1.msra.mxu0 0.0
      %967 = vmatprep.subr.mxu0 0.0
      %968 = vmatpush1.msra.mxu0 0.0
      %969 = vmatprep.subr.mxu0 0.0
      %970 = vmatpush1.msra.mxu0 0.0
      %971 = vmatprep.subr.mxu0 0.0
      %972 = vmatpush1.msra.mxu0 0.0
      %973 = vmatprep.subr.mxu0 0.0
      %974 = vmatpush1.msra.mxu0 0.0
      %975 = vmatprep.subr.mxu0 0.0
      %976 = vmatpush1.msra.mxu0 0.0
      %977 = vmatprep.subr.mxu0 0.0
      %978 = vmatpush1.msra.mxu0 0.0
      %979 = vmatprep.subr.mxu0 0.0
      %980 = vmatpush1.msra.mxu0 0.0
      %981 = vmatprep.subr.mxu0 0.0
      %982 = vmatpush1.msra.mxu0 0.0
      %983 = vmatprep.subr.mxu0 0.0
      %984 = vmatpush1.msra.mxu0 0.0
      %985 = vmatprep.subr.mxu0 0.0
      %986 = vmatpush1.msra.mxu0 0.0
      %987 = vmatprep.subr.mxu0 0.0
      %988 = vmatpush1.msra.mxu0 0.0
      %989 = vmatprep.subr.mxu0 0.0
      %990 = vmatpush1.msra.mxu0 0.0
      %991 = vmatprep.subr.mxu0 0.0
      %992 = vmatpush1.msra.mxu0 0.0
      %993 = vmatprep.subr.mxu0 0.0
      %994 = vmatpush1.msra.mxu0 0.0
      %995 = vmatprep.subr.mxu0 0.0
      %996 = vmatpush1.msra.mxu0 0.0
      %997 = vmatprep.subr.mxu0 0.0
      %998 = vmatpush1.msra.mxu0 0.0
      %999 = vmatprep.subr.mxu0 0.0
      %1000 = vmatpush1.msra.mxu0 0.0
      %1001 = vmatprep.subr.mxu0 0.0
      %1002 = vmatpush1.msra.mxu0 0.0
      %1003 = vmatprep.subr.mxu0 0.0
      %1004 = vmatpush1.msra.mxu0 0.0
      %1005 = vmatprep.subr.mxu0 0.0
      %1006 = vmatpush1.msra.mxu0 0.0
      %1007 = vmatprep.subr.mxu0 0.0
      %1008 = vmatpush1.msra.mxu0 0.0
      %1009 = vmatprep.subr.mxu0 0.0
      %1010 = vmatpush1.msra.mxu0 0.0
      %1011 = vmatprep.subr.mxu0 0.0
      %1012 = vmatpush1.msra.mxu0 0.0
      %1013 = vmatprep.subr.mxu0 0.0
      %1014 = vmatpush1.msra.mxu0 0.0
      %1015 = vmatprep.subr.mxu0 0.0
      %1016 = vmatpush1.msra.mxu0 0.0
      %1017 = vmatprep.mubr.f32.mxu0 0.0
      %1018 = vmatmul.mubr.f32.gmra.mrb[0].mxu0 %v906
      %v1019 = vpop.f32.mrb[0].mxu0
      %v1020 = vadd.f32 0.0, %v1019
      %v1021 = vpop.f32.mrb[0].mxu0
      %1022 = vmatprep.mubr.f32.mxu0 0.0
      %1023 = vmatmul.mubr.f32.gmra.mrb[0].mxu0 %v909
      %v1024 = vpop.f32.mrb[0].mxu0
      %v1025 = vadd.f32 0.0, %v1024
      %v1026 = vpop.f32.mrb[0].mxu0
      %1027 = vmatprep.mubr.f32.mxu0 0.0
      %1028 = vmatmul.mubr.f32.gmra.mrb[0].mxu0 %v912
      %v1029 = vpop.f32.mrb[0].mxu0
      %v1030 = vadd.f32 0.0, %v1029
      %v1031 = vpop.f32.mrb[0].mxu0
      %1032 = vmatprep.mubr.f32.mxu0 0.0
      %1033 = vmatmul.mubr.f32.gmra.mrb[0].mxu0 %v915
      %v1034 = vpop.f32.mrb[0].mxu0
      %v1035 = vadd.f32 0.0, %v1034
      %v1036 = vpop.f32.mrb[0].mxu0
      %1037 = vmatprep.mubr.f32.mxu0 0.0
      %1038 = vmatmul.mubr.f32.gmra.mrb[0].mxu0 %v918
      %v1039 = vpop.f32.mrb[0].mxu0
      %v1040 = vadd.f32 0.0, %v1039
      %v1041 = vpop.f32.mrb[0].mxu0
      %1042 = vmatprep.mubr.f32.mxu0 0.0
      %1043 = vmatmul.mubr.f32.gmra.mrb[0].mxu0 %v921
      %v1044 = vpop.f32.mrb[0].mxu0
      %v1045 = vadd.f32 0.0, %v1044
      %v1046 = vpop.f32.mrb[0].mxu0
      %1047 = vmatprep.mubr.f32.mxu0 0.0
      %1048 = vmatmul.mubr.f32.gmra.mrb[0].mxu0 %v924
      %v1049 = vpop.f32.mrb[0].mxu0
      %v1050 = vadd.f32 0.0, %v1049
      %v1051 = vpop.f32.mrb[0].mxu0
      %1052 = vmatprep.mubr.f32.mxu0 0.0
      %1053 = vmatmul.mubr.f32.gmra.mrb[0].mxu0 %v927
      %v1054 = vpop.f32.mrb[0].mxu0
      %v1055 = vadd.f32 0.0, %v1054
      %v1056 = vpop.f32.mrb[0].mxu0
      %1057 = vmatprep.mubr.f32.mxu0 0.0
      %1058 = vmatmul.mubr.f32.gmra.mrb[0].mxu0 %v930
      %v1059 = vpop.f32.mrb[0].mxu0
      %v1060 = vadd.f32 0.0, %v1059
      %v1061 = vpop.f32.mrb[0].mxu0
      %1062 = vmatprep.mubr.f32.mxu0 0.0
      %1063 = vmatmul.mubr.f32.gmra.mrb[0].mxu0 %v933
      %v1064 = vpop.f32.mrb[0].mxu0
      %v1065 = vadd.f32 0.0, %v1064
      %v1066 = vpop.f32.mrb[0].mxu0
      %1067 = vmatprep.mubr.f32.mxu0 0.0
      %1068 = vmatmul.mubr.f32.gmra.mrb[0].mxu0 %v936
      %v1069 = vpop.f32.mrb[0].mxu0
      %v1070 = vadd.f32 0.0, %v1069
      %v1071 = vpop.f32.mrb[0].mxu0
      %1072 = vmatprep.mubr.f32.mxu0 0.0
      %1073 = vmatmul.mubr.f32.gmra.mrb[0].mxu0 %v939
      %v1074 = vpop.f32.mrb[0].mxu0
      %v1075 = vadd.f32 0.0, %v1074
      %v1076 = vpop.f32.mrb[0].mxu0
      %1077 = vmatprep.mubr.f32.mxu0 0.0
      %1078 = vmatmul.mubr.f32.gmra.mrb[0].mxu0 %v942
      %v1079 = vpop.f32.mrb[0].mxu0
      %v1080 = vadd.f32 0.0, %v1079
      %v1081 = vpop.f32.mrb[0].mxu0
      %1082 = vmatprep.mubr.f32.mxu0 0.0
      %1083 = vmatmul.mubr.f32.gmra.mrb[0].mxu0 %v945
      %v1084 = vpop.f32.mrb[0].mxu0
      %v1085 = vadd.f32 0.0, %v1084
      %v1086 = vpop.f32.mrb[0].mxu0
      %1087 = vmatprep.mubr.f32.mxu0 0.0
      %1088 = vmatmul.mubr.f32.gmra.mrb[0].mxu0 %v948
      %v1089 = vpop.f32.mrb[0].mxu0
      %v1090 = vadd.f32 0.0, %v1089
      %v1091 = vpop.f32.mrb[0].mxu0
      %1092 = vmatprep.mubr.f32.mxu0 0.0
      %1093 = vmatmul.mubr.f32.gmra.mrb[0].mxu0 %v951
      %v1094 = vpop.f32.mrb[0].mxu0
      %v1095 = vadd.f32 0.0, %v1094
      %v1096 = vpop.f32.mrb[0].mxu0
      %1097 = vdwg.mxu0
      %v1098 = vadd.f32 %v870, %v1020
      %v1099 = vadd.f32 %v871, %v1025
      %v1100 = vadd.f32 %v872, %v1030
      %v1101 = vadd.f32 %v873, %v1035
      %v1102 = vadd.f32 %v874, %v1040
      %v1103 = vadd.f32 %v875, %v1045
      %v1104 = vadd.f32 %v876, %v1050
      %v1105 = vadd.f32 %v877, %v1055
      %v1106 = vadd.f32 %v878, %v1060
      %v1107 = vadd.f32 %v879, %v1065
      %v1108 = vadd.f32 %v880, %v1070
      %v1109 = vadd.f32 %v881, %v1075
      %v1110 = vadd.f32 %v882, %v1080
      %v1111 = vadd.f32 %v883, %v1085
      %v1112 = vadd.f32 %v884, %v1090
      %v1113 = vadd.f32 %v885, %v1095
      %v1114 = vld [vmem:[%s886 + $0x1] sm:$0xff]
      %v1115 = vld [vmem:[%s886 + $0x9] sm:$0xff]
      %v1116 = vld [vmem:[%s886 + $0x19] sm:$0xff]
      %v1117 = vld [vmem:[%s886 + $0x21] sm:$0xff]
      %v1118 = vld [vmem:[%s886 + $0x31] sm:$0xff]
      %v1119 = vld [vmem:[%s886 + $0x39] sm:$0xff]
      %v1120 = vld [vmem:[%s886 + $0x49] sm:$0xff]
      %v1121 = vld [vmem:[%s886 + $0x51] sm:$0xff]
      %v1122 = vld [vmem:[%s886 + $0x61] sm:$0xff]
      %v1123 = vld [vmem:[%s886 + $0x69] sm:$0xff]
      %v1124 = vld [vmem:[%s886 + $0x79] sm:$0xff]
      %v1125 = vld [vmem:[%s886 + $0x81] sm:$0xff]
      %v1126 = vld [vmem:[%s886 + $0x91] sm:$0xff]
      %v1127 = vld [vmem:[%s886 + $0x99] sm:$0xff]
      %v1128 = vld [vmem:[%s886 + $0xa9] sm:$0xff]
      %v1129 = vld [vmem:[%s886 + $0xb1] sm:$0xff]
      %s1130 = scalar_lea.vmem %s1, 32
      %v1131 = vld [vmem:[%s1130] sm:$0xff]
      %v1133 = vsel %vm272, %v1114, 0
      %v1136 = vsel %vm272, %v1115, 0
      %v1139 = vsel %vm272, %v1116, 0
      %v1142 = vsel %vm272, %v1117, 0
      %v1145 = vsel %vm272, %v1118, 0
      %v1148 = vsel %vm272, %v1119, 0
      %v1151 = vsel %vm272, %v1120, 0
      %v1154 = vsel %vm272, %v1121, 0
      %v1157 = vsel %vm272, %v1122, 0
      %v1160 = vsel %vm272, %v1123, 0
      %v1163 = vsel %vm272, %v1124, 0
      %v1166 = vsel %vm272, %v1125, 0
      %v1169 = vsel %vm272, %v1126, 0
      %v1172 = vsel %vm272, %v1127, 0
      %v1175 = vsel %vm272, %v1128, 0
      %v1178 = vsel %vm272, %v1129, 0
      %1180 = vmatprep.subr.mxu0 0.0
      %1181 = vmatpush1.msra.mxu0 %v1131
      %1182 = vmatprep.subr.mxu0 0.0
      %1183 = vmatpush1.msra.mxu0 0.0
      %1184 = vmatprep.subr.mxu0 0.0
      %1185 = vmatpush1.msra.mxu0 0.0
      %1186 = vmatprep.subr.mxu0 0.0
      %1187 = vmatpush1.msra.mxu0 0.0
      %1188 = vmatprep.subr.mxu0 0.0
      %1189 = vmatpush1.msra.mxu0 0.0
      %1190 = vmatprep.subr.mxu0 0.0
      %1191 = vmatpush1.msra.mxu0 0.0
      %1192 = vmatprep.subr.mxu0 0.0
      %1193 = vmatpush1.msra.mxu0 0.0
      %1194 = vmatprep.subr.mxu0 0.0
      %1195 = vmatpush1.msra.mxu0 0.0
      %1196 = vmatprep.subr.mxu0 0.0
      %1197 = vmatpush1.msra.mxu0 0.0
      %1198 = vmatprep.subr.mxu0 0.0
      %1199 = vmatpush1.msra.mxu0 0.0
      %1200 = vmatprep.subr.mxu0 0.0
      %1201 = vmatpush1.msra.mxu0 0.0
      %1202 = vmatprep.subr.mxu0 0.0
      %1203 = vmatpush1.msra.mxu0 0.0
      %1204 = vmatprep.subr.mxu0 0.0
      %1205 = vmatpush1.msra.mxu0 0.0
      %1206 = vmatprep.subr.mxu0 0.0
      %1207 = vmatpush1.msra.mxu0 0.0
      %1208 = vmatprep.subr.mxu0 0.0
      %1209 = vmatpush1.msra.mxu0 0.0
      %1210 = vmatprep.subr.mxu0 0.0
      %1211 = vmatpush1.msra.mxu0 0.0
      %1212 = vmatprep.subr.mxu0 0.0
      %1213 = vmatpush1.msra.mxu0 0.0
      %1214 = vmatprep.subr.mxu0 0.0
      %1215 = vmatpush1.msra.mxu0 0.0
      %1216 = vmatprep.subr.mxu0 0.0
      %1217 = vmatpush1.msra.mxu0 0.0
      %1218 = vmatprep.subr.mxu0 0.0
      %1219 = vmatpush1.msra.mxu0 0.0
      %1220 = vmatprep.subr.mxu0 0.0
      %1221 = vmatpush1.msra.mxu0 0.0
      %1222 = vmatprep.subr.mxu0 0.0
      %1223 = vmatpush1.msra.mxu0 0.0
      %1224 = vmatprep.subr.mxu0 0.0
      %1225 = vmatpush1.msra.mxu0 0.0
      %1226 = vmatprep.subr.mxu0 0.0
      %1227 = vmatpush1.msra.mxu0 0.0
      %1228 = vmatprep.subr.mxu0 0.0
      %1229 = vmatpush1.msra.mxu0 0.0
      %1230 = vmatprep.subr.mxu0 0.0
      %1231 = vmatpush1.msra.mxu0 0.0
      %1232 = vmatprep.subr.mxu0 0.0
      %1233 = vmatpush1.msra.mxu0 0.0
      %1234 = vmatprep.subr.mxu0 0.0
      %1235 = vmatpush1.msra.mxu0 0.0
      %1236 = vmatprep.subr.mxu0 0.0
      %1237 = vmatpush1.msra.mxu0 0.0
      %1238 = vmatprep.subr.mxu0 0.0
      %1239 = vmatpush1.msra.mxu0 0.0
      %1240 = vmatprep.subr.mxu0 0.0
      %1241 = vmatpush1.msra.mxu0 0.0
      %1242 = vmatprep.subr.mxu0 0.0
      %1243 = vmatpush1.msra.mxu0 0.0
      %1244 = vmatprep.mubr.f32.mxu0 0.0
      %1245 = vmatmul.mubr.f32.gmra.mrb[0].mxu0 %v1133
      %v1246 = vpop.f32.mrb[0].mxu0
      %v1247 = vadd.f32 0.0, %v1246
      %v1248 = vpop.f32.mrb[0].mxu0
      %1249 = vmatprep.mubr.f32.mxu0 0.0
      %1250 = vmatmul.mubr.f32.gmra.mrb[0].mxu0 %v1136
      %v1251 = vpop.f32.mrb[0].mxu0
      %v1252 = vadd.f32 0.0, %v1251
      %v1253 = vpop.f32.mrb[0].mxu0
      %1254 = vmatprep.mubr.f32.mxu0 0.0
      %1255 = vmatmul.mubr.f32.gmra.mrb[0].mxu0 %v1139
      %v1256 = vpop.f32.mrb[0].mxu0
      %v1257 = vadd.f32 0.0, %v1256
      %v1258 = vpop.f32.mrb[0].mxu0
      %1259 = vmatprep.mubr.f32.mxu0 0.0
      %1260 = vmatmul.mubr.f32.gmra.mrb[0].mxu0 %v1142
      %v1261 = vpop.f32.mrb[0].mxu0
      %v1262 = vadd.f32 0.0, %v1261
      %v1263 = vpop.f32.mrb[0].mxu0
      %1264 = vmatprep.mubr.f32.mxu0 0.0
      %1265 = vmatmul.mubr.f32.gmra.mrb[0].mxu0 %v1145
      %v1266 = vpop.f32.mrb[0].mxu0
      %v1267 = vadd.f32 0.0, %v1266
      %v1268 = vpop.f32.mrb[0].mxu0
      %1269 = vmatprep.mubr.f32.mxu0 0.0
      %1270 = vmatmul.mubr.f32.gmra.mrb[0].mxu0 %v1148
      %v1271 = vpop.f32.mrb[0].mxu0
      %v1272 = vadd.f32 0.0, %v1271
      %v1273 = vpop.f32.mrb[0].mxu0
      %1274 = vmatprep.mubr.f32.mxu0 0.0
      %1275 = vmatmul.mubr.f32.gmra.mrb[0].mxu0 %v1151
      %v1276 = vpop.f32.mrb[0].mxu0
      %v1277 = vadd.f32 0.0, %v1276
      %v1278 = vpop.f32.mrb[0].mxu0
      %1279 = vmatprep.mubr.f32.mxu0 0.0
      %1280 = vmatmul.mubr.f32.gmra.mrb[0].mxu0 %v1154
      %v1281 = vpop.f32.mrb[0].mxu0
      %v1282 = vadd.f32 0.0, %v1281
      %v1283 = vpop.f32.mrb[0].mxu0
      %1284 = vmatprep.mubr.f32.mxu0 0.0
      %1285 = vmatmul.mubr.f32.gmra.mrb[0].mxu0 %v1157
      %v1286 = vpop.f32.mrb[0].mxu0
      %v1287 = vadd.f32 0.0, %v1286
      %v1288 = vpop.f32.mrb[0].mxu0
      %1289 = vmatprep.mubr.f32.mxu0 0.0
      %1290 = vmatmul.mubr.f32.gmra.mrb[0].mxu0 %v1160
      %v1291 = vpop.f32.mrb[0].mxu0
      %v1292 = vadd.f32 0.0, %v1291
      %v1293 = vpop.f32.mrb[0].mxu0
      %1294 = vmatprep.mubr.f32.mxu0 0.0
      %1295 = vmatmul.mubr.f32.gmra.mrb[0].mxu0 %v1163
      %v1296 = vpop.f32.mrb[0].mxu0
      %v1297 = vadd.f32 0.0, %v1296
      %v1298 = vpop.f32.mrb[0].mxu0
      %1299 = vmatprep.mubr.f32.mxu0 0.0
      %1300 = vmatmul.mubr.f32.gmra.mrb[0].mxu0 %v1166
      %v1301 = vpop.f32.mrb[0].mxu0
      %v1302 = vadd.f32 0.0, %v1301
      %v1303 = vpop.f32.mrb[0].mxu0
      %1304 = vmatprep.mubr.f32.mxu0 0.0
      %1305 = vmatmul.mubr.f32.gmra.mrb[0].mxu0 %v1169
      %v1306 = vpop.f32.mrb[0].mxu0
      %v1307 = vadd.f32 0.0, %v1306
      %v1308 = vpop.f32.mrb[0].mxu0
      %1309 = vmatprep.mubr.f32.mxu0 0.0
      %1310 = vmatmul.mubr.f32.gmra.mrb[0].mxu0 %v1172
      %v1311 = vpop.f32.mrb[0].mxu0
      %v1312 = vadd.f32 0.0, %v1311
      %v1313 = vpop.f32.mrb[0].mxu0
      %1314 = vmatprep.mubr.f32.mxu0 0.0
      %1315 = vmatmul.mubr.f32.gmra.mrb[0].mxu0 %v1175
      %v1316 = vpop.f32.mrb[0].mxu0
      %v1317 = vadd.f32 0.0, %v1316
      %v1318 = vpop.f32.mrb[0].mxu0
      %1319 = vmatprep.mubr.f32.mxu0 0.0
      %1320 = vmatmul.mubr.f32.gmra.mrb[0].mxu0 %v1178
      %v1321 = vpop.f32.mrb[0].mxu0
      %v1322 = vadd.f32 0.0, %v1321
      %v1323 = vpop.f32.mrb[0].mxu0
      %1324 = vdwg.mxu0
      %v1325 = vadd.f32 %v1098, %v1247
      %v1326 = vadd.f32 %v1099, %v1252
      %v1327 = vadd.f32 %v1100, %v1257
      %v1328 = vadd.f32 %v1101, %v1262
      %v1329 = vadd.f32 %v1102, %v1267
      %v1330 = vadd.f32 %v1103, %v1272
      %v1331 = vadd.f32 %v1104, %v1277
      %v1332 = vadd.f32 %v1105, %v1282
      %v1333 = vadd.f32 %v1106, %v1287
      %v1334 = vadd.f32 %v1107, %v1292
      %v1335 = vadd.f32 %v1108, %v1297
      %v1336 = vadd.f32 %v1109, %v1302
      %v1337 = vadd.f32 %v1110, %v1307
      %v1338 = vadd.f32 %v1111, %v1312
      %v1339 = vadd.f32 %v1112, %v1317
      %v1340 = vadd.f32 %v1113, %v1322
      %v1341 = vld [vmem:[%s886 + $0x2] sm:$0xff]
      %v1342 = vld [vmem:[%s886 + $0xa] sm:$0xff]
      %v1343 = vld [vmem:[%s886 + $0x1a] sm:$0xff]
      %v1344 = vld [vmem:[%s886 + $0x22] sm:$0xff]
      %v1345 = vld [vmem:[%s886 + $0x32] sm:$0xff]
      %v1346 = vld [vmem:[%s886 + $0x3a] sm:$0xff]
      %v1347 = vld [vmem:[%s886 + $0x4a] sm:$0xff]
      %v1348 = vld [vmem:[%s886 + $0x52] sm:$0xff]
      %v1349 = vld [vmem:[%s886 + $0x62] sm:$0xff]
      %v1350 = vld [vmem:[%s886 + $0x6a] sm:$0xff]
      %v1351 = vld [vmem:[%s886 + $0x7a] sm:$0xff]
      %v1352 = vld [vmem:[%s886 + $0x82] sm:$0xff]
      %v1353 = vld [vmem:[%s886 + $0x92] sm:$0xff]
      %v1354 = vld [vmem:[%s886 + $0x9a] sm:$0xff]
      %v1355 = vld [vmem:[%s886 + $0xaa] sm:$0xff]
      %v1356 = vld [vmem:[%s886 + $0xb2] sm:$0xff]
      %s1357 = scalar_lea.vmem %s1, 40
      %v1358 = vld [vmem:[%s1357] sm:$0xff]
      %v1360 = vsel %vm272, %v1341, 0
      %v1363 = vsel %vm272, %v1342, 0
      %v1366 = vsel %vm272, %v1343, 0
      %v1369 = vsel %vm272, %v1344, 0
      %v1372 = vsel %vm272, %v1345, 0
      %v1375 = vsel %vm272, %v1346, 0
      %v1378 = vsel %vm272, %v1347, 0
      %v1381 = vsel %vm272, %v1348, 0
      %v1384 = vsel %vm272, %v1349, 0
      %v1387 = vsel %vm272, %v1350, 0
      %v1390 = vsel %vm272, %v1351, 0
      %v1393 = vsel %vm272, %v1352, 0
      %v1396 = vsel %vm272, %v1353, 0
      %v1399 = vsel %vm272, %v1354, 0
      %v1402 = vsel %vm272, %v1355, 0
      %v1405 = vsel %vm272, %v1356, 0
      %1407 = vmatprep.subr.mxu0 0.0
      %1408 = vmatpush1.msra.mxu0 %v1358
      %1409 = vmatprep.subr.mxu0 0.0
      %1410 = vmatpush1.msra.mxu0 0.0
      %1411 = vmatprep.subr.mxu0 0.0
      %1412 = vmatpush1.msra.mxu0 0.0
      %1413 = vmatprep.subr.mxu0 0.0
      %1414 = vmatpush1.msra.mxu0 0.0
      %1415 = vmatprep.subr.mxu0 0.0
      %1416 = vmatpush1.msra.mxu0 0.0
      %1417 = vmatprep.subr.mxu0 0.0
      %1418 = vmatpush1.msra.mxu0 0.0
      %1419 = vmatprep.subr.mxu0 0.0
      %1420 = vmatpush1.msra.mxu0 0.0
      %1421 = vmatprep.subr.mxu0 0.0
      %1422 = vmatpush1.msra.mxu0 0.0
      %1423 = vmatprep.subr.mxu0 0.0
      %1424 = vmatpush1.msra.mxu0 0.0
      %1425 = vmatprep.subr.mxu0 0.0
      %1426 = vmatpush1.msra.mxu0 0.0
      %1427 = vmatprep.subr.mxu0 0.0
      %1428 = vmatpush1.msra.mxu0 0.0
      %1429 = vmatprep.subr.mxu0 0.0
      %1430 = vmatpush1.msra.mxu0 0.0
      %1431 = vmatprep.subr.mxu0 0.0
      %1432 = vmatpush1.msra.mxu0 0.0
      %1433 = vmatprep.subr.mxu0 0.0
      %1434 = vmatpush1.msra.mxu0 0.0
      %1435 = vmatprep.subr.mxu0 0.0
      %1436 = vmatpush1.msra.mxu0 0.0
      %1437 = vmatprep.subr.mxu0 0.0
      %1438 = vmatpush1.msra.mxu0 0.0
      %1439 = vmatprep.subr.mxu0 0.0
      %1440 = vmatpush1.msra.mxu0 0.0
      %1441 = vmatprep.subr.mxu0 0.0
      %1442 = vmatpush1.msra.mxu0 0.0
      %1443 = vmatprep.subr.mxu0 0.0
      %1444 = vmatpush1.msra.mxu0 0.0
      %1445 = vmatprep.subr.mxu0 0.0
      %1446 = vmatpush1.msra.mxu0 0.0
      %1447 = vmatprep.subr.mxu0 0.0
      %1448 = vmatpush1.msra.mxu0 0.0
      %1449 = vmatprep.subr.mxu0 0.0
      %1450 = vmatpush1.msra.mxu0 0.0
      %1451 = vmatprep.subr.mxu0 0.0
      %1452 = vmatpush1.msra.mxu0 0.0
      %1453 = vmatprep.subr.mxu0 0.0
      %1454 = vmatpush1.msra.mxu0 0.0
      %1455 = vmatprep.subr.mxu0 0.0
      %1456 = vmatpush1.msra.mxu0 0.0
      %1457 = vmatprep.subr.mxu0 0.0
      %1458 = vmatpush1.msra.mxu0 0.0
      %1459 = vmatprep.subr.mxu0 0.0
      %1460 = vmatpush1.msra.mxu0 0.0
      %1461 = vmatprep.subr.mxu0 0.0
      %1462 = vmatpush1.msra.mxu0 0.0
      %1463 = vmatprep.subr.mxu0 0.0
      %1464 = vmatpush1.msra.mxu0 0.0
      %1465 = vmatprep.subr.mxu0 0.0
      %1466 = vmatpush1.msra.mxu0 0.0
      %1467 = vmatprep.subr.mxu0 0.0
      %1468 = vmatpush1.msra.mxu0 0.0
      %1469 = vmatprep.subr.mxu0 0.0
      %1470 = vmatpush1.msra.mxu0 0.0
      %1471 = vmatprep.mubr.f32.mxu0 0.0
      %1472 = vmatmul.mubr.f32.gmra.mrb[0].mxu0 %v1360
      %v1473 = vpop.f32.mrb[0].mxu0
      %v1474 = vadd.f32 0.0, %v1473
      %v1475 = vpop.f32.mrb[0].mxu0
      %1476 = vmatprep.mubr.f32.mxu0 0.0
      %1477 = vmatmul.mubr.f32.gmra.mrb[0].mxu0 %v1363
      %v1478 = vpop.f32.mrb[0].mxu0
      %v1479 = vadd.f32 0.0, %v1478
      %v1480 = vpop.f32.mrb[0].mxu0
      %1481 = vmatprep.mubr.f32.mxu0 0.0
      %1482 = vmatmul.mubr.f32.gmra.mrb[0].mxu0 %v1366
      %v1483 = vpop.f32.mrb[0].mxu0
      %v1484 = vadd.f32 0.0, %v1483
      %v1485 = vpop.f32.mrb[0].mxu0
      %1486 = vmatprep.mubr.f32.mxu0 0.0
      %1487 = vmatmul.mubr.f32.gmra.mrb[0].mxu0 %v1369
      %v1488 = vpop.f32.mrb[0].mxu0
      %v1489 = vadd.f32 0.0, %v1488
      %v1490 = vpop.f32.mrb[0].mxu0
      %1491 = vmatprep.mubr.f32.mxu0 0.0
      %1492 = vmatmul.mubr.f32.gmra.mrb[0].mxu0 %v1372
      %v1493 = vpop.f32.mrb[0].mxu0
      %v1494 = vadd.f32 0.0, %v1493
      %v1495 = vpop.f32.mrb[0].mxu0
      %1496 = vmatprep.mubr.f32.mxu0 0.0
      %1497 = vmatmul.mubr.f32.gmra.mrb[0].mxu0 %v1375
      %v1498 = vpop.f32.mrb[0].mxu0
      %v1499 = vadd.f32 0.0, %v1498
      %v1500 = vpop.f32.mrb[0].mxu0
      %1501 = vmatprep.mubr.f32.mxu0 0.0
      %1502 = vmatmul.mubr.f32.gmra.mrb[0].mxu0 %v1378
      %v1503 = vpop.f32.mrb[0].mxu0
      %v1504 = vadd.f32 0.0, %v1503
      %v1505 = vpop.f32.mrb[0].mxu0
      %1506 = vmatprep.mubr.f32.mxu0 0.0
      %1507 = vmatmul.mubr.f32.gmra.mrb[0].mxu0 %v1381
      %v1508 = vpop.f32.mrb[0].mxu0
      %v1509 = vadd.f32 0.0, %v1508
      %v1510 = vpop.f32.mrb[0].mxu0
      %1511 = vmatprep.mubr.f32.mxu0 0.0
      %1512 = vmatmul.mubr.f32.gmra.mrb[0].mxu0 %v1384
      %v1513 = vpop.f32.mrb[0].mxu0
      %v1514 = vadd.f32 0.0, %v1513
      %v1515 = vpop.f32.mrb[0].mxu0
      %1516 = vmatprep.mubr.f32.mxu0 0.0
      %1517 = vmatmul.mubr.f32.gmra.mrb[0].mxu0 %v1387
      %v1518 = vpop.f32.mrb[0].mxu0
      %v1519 = vadd.f32 0.0, %v1518
      %v1520 = vpop.f32.mrb[0].mxu0
      %1521 = vmatprep.mubr.f32.mxu0 0.0
      %1522 = vmatmul.mubr.f32.gmra.mrb[0].mxu0 %v1390
      %v1523 = vpop.f32.mrb[0].mxu0
      %v1524 = vadd.f32 0.0, %v1523
      %v1525 = vpop.f32.mrb[0].mxu0
      %1526 = vmatprep.mubr.f32.mxu0 0.0
      %1527 = vmatmul.mubr.f32.gmra.mrb[0].mxu0 %v1393
      %v1528 = vpop.f32.mrb[0].mxu0
      %v1529 = vadd.f32 0.0, %v1528
      %v1530 = vpop.f32.mrb[0].mxu0
      %1531 = vmatprep.mubr.f32.mxu0 0.0
      %1532 = vmatmul.mubr.f32.gmra.mrb[0].mxu0 %v1396
      %v1533 = vpop.f32.mrb[0].mxu0
      %v1534 = vadd.f32 0.0, %v1533
      %v1535 = vpop.f32.mrb[0].mxu0
      %1536 = vmatprep.mubr.f32.mxu0 0.0
      %1537 = vmatmul.mubr.f32.gmra.mrb[0].mxu0 %v1399
      %v1538 = vpop.f32.mrb[0].mxu0
      %v1539 = vadd.f32 0.0, %v1538
      %v1540 = vpop.f32.mrb[0].mxu0
      %1541 = vmatprep.mubr.f32.mxu0 0.0
      %1542 = vmatmul.mubr.f32.gmra.mrb[0].mxu0 %v1402
      %v1543 = vpop.f32.mrb[0].mxu0
      %v1544 = vadd.f32 0.0, %v1543
      %v1545 = vpop.f32.mrb[0].mxu0
      %1546 = vmatprep.mubr.f32.mxu0 0.0
      %1547 = vmatmul.mubr.f32.gmra.mrb[0].mxu0 %v1405
      %v1548 = vpop.f32.mrb[0].mxu0
      %v1549 = vadd.f32 0.0, %v1548
      %v1550 = vpop.f32.mrb[0].mxu0
      %1551 = vdwg.mxu0
      %v1552 = vadd.f32 %v1325, %v1474
      %v1553 = vadd.f32 %v1326, %v1479
      %v1554 = vadd.f32 %v1327, %v1484
      %v1555 = vadd.f32 %v1328, %v1489
      %v1556 = vadd.f32 %v1329, %v1494
      %v1557 = vadd.f32 %v1330, %v1499
      %v1558 = vadd.f32 %v1331, %v1504
      %v1559 = vadd.f32 %v1332, %v1509
      %v1560 = vadd.f32 %v1333, %v1514
      %v1561 = vadd.f32 %v1334, %v1519
      %v1562 = vadd.f32 %v1335, %v1524
      %v1563 = vadd.f32 %v1336, %v1529
      %v1564 = vadd.f32 %v1337, %v1534
      %v1565 = vadd.f32 %v1338, %v1539
      %v1566 = vadd.f32 %v1339, %v1544
      %v1567 = vadd.f32 %v1340, %v1549
      %s1568 = scalar_lea.vmem %s225, 48
      %v1569 = vld [vmem:[%s1568] sm:$0xff]
      %v1570 = vld [vmem:[%s1568 + $0x8] sm:$0xff]
      %v1571 = vld [vmem:[%s1568 + $0x18] sm:$0xff]
      %v1572 = vld [vmem:[%s1568 + $0x20] sm:$0xff]
      %v1573 = vld [vmem:[%s1568 + $0x30] sm:$0xff]
      %v1574 = vld [vmem:[%s1568 + $0x38] sm:$0xff]
      %v1575 = vld [vmem:[%s1568 + $0x48] sm:$0xff]
      %v1576 = vld [vmem:[%s1568 + $0x50] sm:$0xff]
      %v1577 = vld [vmem:[%s1568 + $0x60] sm:$0xff]
      %v1578 = vld [vmem:[%s1568 + $0x68] sm:$0xff]
      %v1579 = vld [vmem:[%s1568 + $0x78] sm:$0xff]
      %v1580 = vld [vmem:[%s1568 + $0x80] sm:$0xff]
      %v1581 = vld [vmem:[%s1568 + $0x90] sm:$0xff]
      %v1582 = vld [vmem:[%s1568 + $0x98] sm:$0xff]
      %v1583 = vld [vmem:[%s1568 + $0xa8] sm:$0xff]
      %v1584 = vld [vmem:[%s1568 + $0xb0] sm:$0xff]
      %s1585 = scalar_lea.vmem %s1, 48
      %v1586 = vld [vmem:[%s1585] sm:$0xff]
      %v1588 = vsel %vm272, %v1569, 0
      %v1591 = vsel %vm272, %v1570, 0
      %v1594 = vsel %vm272, %v1571, 0
      %v1597 = vsel %vm272, %v1572, 0
      %v1600 = vsel %vm272, %v1573, 0
      %v1603 = vsel %vm272, %v1574, 0
      %v1606 = vsel %vm272, %v1575, 0
      %v1609 = vsel %vm272, %v1576, 0
      %v1612 = vsel %vm272, %v1577, 0
      %v1615 = vsel %vm272, %v1578, 0
      %v1618 = vsel %vm272, %v1579, 0
      %v1621 = vsel %vm272, %v1580, 0
      %v1624 = vsel %vm272, %v1581, 0
      %v1627 = vsel %vm272, %v1582, 0
      %v1630 = vsel %vm272, %v1583, 0
      %v1633 = vsel %vm272, %v1584, 0
      %1635 = vmatprep.subr.mxu0 0.0
      %1636 = vmatpush1.msra.mxu0 %v1586
      %1637 = vmatprep.subr.mxu0 0.0
      %1638 = vmatpush1.msra.mxu0 0.0
      %1639 = vmatprep.subr.mxu0 0.0
      %1640 = vmatpush1.msra.mxu0 0.0
      %1641 = vmatprep.subr.mxu0 0.0
      %1642 = vmatpush1.msra.mxu0 0.0
      %1643 = vmatprep.subr.mxu0 0.0
      %1644 = vmatpush1.msra.mxu0 0.0
      %1645 = vmatprep.subr.mxu0 0.0
      %1646 = vmatpush1.msra.mxu0 0.0
      %1647 = vmatprep.subr.mxu0 0.0
      %1648 = vmatpush1.msra.mxu0 0.0
      %1649 = vmatprep.subr.mxu0 0.0
      %1650 = vmatpush1.msra.mxu0 0.0
      %1651 = vmatprep.subr.mxu0 0.0
      %1652 = vmatpush1.msra.mxu0 0.0
      %1653 = vmatprep.subr.mxu0 0.0
      %1654 = vmatpush1.msra.mxu0 0.0
      %1655 = vmatprep.subr.mxu0 0.0
      %1656 = vmatpush1.msra.mxu0 0.0
      %1657 = vmatprep.subr.mxu0 0.0
      %1658 = vmatpush1.msra.mxu0 0.0
      %1659 = vmatprep.subr.mxu0 0.0
      %1660 = vmatpush1.msra.mxu0 0.0
      %1661 = vmatprep.subr.mxu0 0.0
      %1662 = vmatpush1.msra.mxu0 0.0
      %1663 = vmatprep.subr.mxu0 0.0
      %1664 = vmatpush1.msra.mxu0 0.0
      %1665 = vmatprep.subr.mxu0 0.0
      %1666 = vmatpush1.msra.mxu0 0.0
      %1667 = vmatprep.subr.mxu0 0.0
      %1668 = vmatpush1.msra.mxu0 0.0
      %1669 = vmatprep.subr.mxu0 0.0
      %1670 = vmatpush1.msra.mxu0 0.0
      %1671 = vmatprep.subr.mxu0 0.0
      %1672 = vmatpush1.msra.mxu0 0.0
      %1673 = vmatprep.subr.mxu0 0.0
      %1674 = vmatpush1.msra.mxu0 0.0
      %1675 = vmatprep.subr.mxu0 0.0
      %1676 = vmatpush1.msra.mxu0 0.0
      %1677 = vmatprep.subr.mxu0 0.0
      %1678 = vmatpush1.msra.mxu0 0.0
      %1679 = vmatprep.subr.mxu0 0.0
      %1680 = vmatpush1.msra.mxu0 0.0
      %1681 = vmatprep.subr.mxu0 0.0
      %1682 = vmatpush1.msra.mxu0 0.0
      %1683 = vmatprep.subr.mxu0 0.0
      %1684 = vmatpush1.msra.mxu0 0.0
      %1685 = vmatprep.subr.mxu0 0.0
      %1686 = vmatpush1.msra.mxu0 0.0
      %1687 = vmatprep.subr.mxu0 0.0
      %1688 = vmatpush1.msra.mxu0 0.0
      %1689 = vmatprep.subr.mxu0 0.0
      %1690 = vmatpush1.msra.mxu0 0.0
      %1691 = vmatprep.subr.mxu0 0.0
      %1692 = vmatpush1.msra.mxu0 0.0
      %1693 = vmatprep.subr.mxu0 0.0
      %1694 = vmatpush1.msra.mxu0 0.0
      %1695 = vmatprep.subr.mxu0 0.0
      %1696 = vmatpush1.msra.mxu0 0.0
      %1697 = vmatprep.subr.mxu0 0.0
      %1698 = vmatpush1.msra.mxu0 0.0
      %1699 = vmatprep.mubr.f32.mxu0 0.0
      %1700 = vmatmul.mubr.f32.gmra.mrb[0].mxu0 %v1588
      %v1701 = vpop.f32.mrb[0].mxu0
      %v1702 = vadd.f32 0.0, %v1701
      %v1703 = vpop.f32.mrb[0].mxu0
      %1704 = vmatprep.mubr.f32.mxu0 0.0
      %1705 = vmatmul.mubr.f32.gmra.mrb[0].mxu0 %v1591
      %v1706 = vpop.f32.mrb[0].mxu0
      %v1707 = vadd.f32 0.0, %v1706
      %v1708 = vpop.f32.mrb[0].mxu0
      %1709 = vmatprep.mubr.f32.mxu0 0.0
      %1710 = vmatmul.mubr.f32.gmra.mrb[0].mxu0 %v1594
      %v1711 = vpop.f32.mrb[0].mxu0
      %v1712 = vadd.f32 0.0, %v1711
      %v1713 = vpop.f32.mrb[0].mxu0
      %1714 = vmatprep.mubr.f32.mxu0 0.0
      %1715 = vmatmul.mubr.f32.gmra.mrb[0].mxu0 %v1597
      %v1716 = vpop.f32.mrb[0].mxu0
      %v1717 = vadd.f32 0.0, %v1716
      %v1718 = vpop.f32.mrb[0].mxu0
      %1719 = vmatprep.mubr.f32.mxu0 0.0
      %1720 = vmatmul.mubr.f32.gmra.mrb[0].mxu0 %v1600
      %v1721 = vpop.f32.mrb[0].mxu0
      %v1722 = vadd.f32 0.0, %v1721
      %v1723 = vpop.f32.mrb[0].mxu0
      %1724 = vmatprep.mubr.f32.mxu0 0.0
      %1725 = vmatmul.mubr.f32.gmra.mrb[0].mxu0 %v1603
      %v1726 = vpop.f32.mrb[0].mxu0
      %v1727 = vadd.f32 0.0, %v1726
      %v1728 = vpop.f32.mrb[0].mxu0
      %1729 = vmatprep.mubr.f32.mxu0 0.0
      %1730 = vmatmul.mubr.f32.gmra.mrb[0].mxu0 %v1606
      %v1731 = vpop.f32.mrb[0].mxu0
      %v1732 = vadd.f32 0.0, %v1731
      %v1733 = vpop.f32.mrb[0].mxu0
      %1734 = vmatprep.mubr.f32.mxu0 0.0
      %1735 = vmatmul.mubr.f32.gmra.mrb[0].mxu0 %v1609
      %v1736 = vpop.f32.mrb[0].mxu0
      %v1737 = vadd.f32 0.0, %v1736
      %v1738 = vpop.f32.mrb[0].mxu0
      %1739 = vmatprep.mubr.f32.mxu0 0.0
      %1740 = vmatmul.mubr.f32.gmra.mrb[0].mxu0 %v1612
      %v1741 = vpop.f32.mrb[0].mxu0
      %v1742 = vadd.f32 0.0, %v1741
      %v1743 = vpop.f32.mrb[0].mxu0
      %1744 = vmatprep.mubr.f32.mxu0 0.0
      %1745 = vmatmul.mubr.f32.gmra.mrb[0].mxu0 %v1615
      %v1746 = vpop.f32.mrb[0].mxu0
      %v1747 = vadd.f32 0.0, %v1746
      %v1748 = vpop.f32.mrb[0].mxu0
      %1749 = vmatprep.mubr.f32.mxu0 0.0
      %1750 = vmatmul.mubr.f32.gmra.mrb[0].mxu0 %v1618
      %v1751 = vpop.f32.mrb[0].mxu0
      %v1752 = vadd.f32 0.0, %v1751
      %v1753 = vpop.f32.mrb[0].mxu0
      %1754 = vmatprep.mubr.f32.mxu0 0.0
      %1755 = vmatmul.mubr.f32.gmra.mrb[0].mxu0 %v1621
      %v1756 = vpop.f32.mrb[0].mxu0
      %v1757 = vadd.f32 0.0, %v1756
      %v1758 = vpop.f32.mrb[0].mxu0
      %1759 = vmatprep.mubr.f32.mxu0 0.0
      %1760 = vmatmul.mubr.f32.gmra.mrb[0].mxu0 %v1624
      %v1761 = vpop.f32.mrb[0].mxu0
      %v1762 = vadd.f32 0.0, %v1761
      %v1763 = vpop.f32.mrb[0].mxu0
      %1764 = vmatprep.mubr.f32.mxu0 0.0
      %1765 = vmatmul.mubr.f32.gmra.mrb[0].mxu0 %v1627
      %v1766 = vpop.f32.mrb[0].mxu0
      %v1767 = vadd.f32 0.0, %v1766
      %v1768 = vpop.f32.mrb[0].mxu0
      %1769 = vmatprep.mubr.f32.mxu0 0.0
      %1770 = vmatmul.mubr.f32.gmra.mrb[0].mxu0 %v1630
      %v1771 = vpop.f32.mrb[0].mxu0
      %v1772 = vadd.f32 0.0, %v1771
      %v1773 = vpop.f32.mrb[0].mxu0
      %1774 = vmatprep.mubr.f32.mxu0 0.0
      %1775 = vmatmul.mubr.f32.gmra.mrb[0].mxu0 %v1633
      %v1776 = vpop.f32.mrb[0].mxu0
      %v1777 = vadd.f32 0.0, %v1776
      %v1778 = vpop.f32.mrb[0].mxu0
      %1779 = vdwg.mxu0
      %v1780 = vadd.f32 %v1552, %v1702
      %v1781 = vadd.f32 %v1553, %v1707
      %v1782 = vadd.f32 %v1554, %v1712
      %v1783 = vadd.f32 %v1555, %v1717
      %v1784 = vadd.f32 %v1556, %v1722
      %v1785 = vadd.f32 %v1557, %v1727
      %v1786 = vadd.f32 %v1558, %v1732
      %v1787 = vadd.f32 %v1559, %v1737
      %v1788 = vadd.f32 %v1560, %v1742
      %v1789 = vadd.f32 %v1561, %v1747
      %v1790 = vadd.f32 %v1562, %v1752
      %v1791 = vadd.f32 %v1563, %v1757
      %v1792 = vadd.f32 %v1564, %v1762
      %v1793 = vadd.f32 %v1565, %v1767
      %v1794 = vadd.f32 %v1566, %v1772
      %v1795 = vadd.f32 %v1567, %v1777
      %v1796 = vld [vmem:[%s1568 + $0x1] sm:$0xff]
      %v1797 = vld [vmem:[%s1568 + $0x9] sm:$0xff]
      %v1798 = vld [vmem:[%s1568 + $0x19] sm:$0xff]
      %v1799 = vld [vmem:[%s1568 + $0x21] sm:$0xff]
      %v1800 = vld [vmem:[%s1568 + $0x31] sm:$0xff]
      %v1801 = vld [vmem:[%s1568 + $0x39] sm:$0xff]
      %v1802 = vld [vmem:[%s1568 + $0x49] sm:$0xff]
      %v1803 = vld [vmem:[%s1568 + $0x51] sm:$0xff]
      %v1804 = vld [vmem:[%s1568 + $0x61] sm:$0xff]
      %v1805 = vld [vmem:[%s1568 + $0x69] sm:$0xff]
      %v1806 = vld [vmem:[%s1568 + $0x79] sm:$0xff]
      %v1807 = vld [vmem:[%s1568 + $0x81] sm:$0xff]
      %v1808 = vld [vmem:[%s1568 + $0x91] sm:$0xff]
      %v1809 = vld [vmem:[%s1568 + $0x99] sm:$0xff]
      %v1810 = vld [vmem:[%s1568 + $0xa9] sm:$0xff]
      %v1811 = vld [vmem:[%s1568 + $0xb1] sm:$0xff]
      %s1812 = scalar_lea.vmem %s1, 56
      %v1813 = vld [vmem:[%s1812] sm:$0xff]
      %v1815 = vsel %vm272, %v1796, 0
      %v1818 = vsel %vm272, %v1797, 0
      %v1821 = vsel %vm272, %v1798, 0
      %v1824 = vsel %vm272, %v1799, 0
      %v1827 = vsel %vm272, %v1800, 0
      %v1830 = vsel %vm272, %v1801, 0
      %v1833 = vsel %vm272, %v1802, 0
      %v1836 = vsel %vm272, %v1803, 0
      %v1839 = vsel %vm272, %v1804, 0
      %v1842 = vsel %vm272, %v1805, 0
      %v1845 = vsel %vm272, %v1806, 0
      %v1848 = vsel %vm272, %v1807, 0
      %v1851 = vsel %vm272, %v1808, 0
      %v1854 = vsel %vm272, %v1809, 0
      %v1857 = vsel %vm272, %v1810, 0
      %v1860 = vsel %vm272, %v1811, 0
      %1862 = vmatprep.subr.mxu0 0.0
      %1863 = vmatpush1.msra.mxu0 %v1813
      %1864 = vmatprep.subr.mxu0 0.0
      %1865 = vmatpush1.msra.mxu0 0.0
      %1866 = vmatprep.subr.mxu0 0.0
      %1867 = vmatpush1.msra.mxu0 0.0
      %1868 = vmatprep.subr.mxu0 0.0
      %1869 = vmatpush1.msra.mxu0 0.0
      %1870 = vmatprep.subr.mxu0 0.0
      %1871 = vmatpush1.msra.mxu0 0.0
      %1872 = vmatprep.subr.mxu0 0.0
      %1873 = vmatpush1.msra.mxu0 0.0
      %1874 = vmatprep.subr.mxu0 0.0
      %1875 = vmatpush1.msra.mxu0 0.0
      %1876 = vmatprep.subr.mxu0 0.0
      %1877 = vmatpush1.msra.mxu0 0.0
      %1878 = vmatprep.subr.mxu0 0.0
      %1879 = vmatpush1.msra.mxu0 0.0
      %1880 = vmatprep.subr.mxu0 0.0
      %1881 = vmatpush1.msra.mxu0 0.0
      %1882 = vmatprep.subr.mxu0 0.0
      %1883 = vmatpush1.msra.mxu0 0.0
      %1884 = vmatprep.subr.mxu0 0.0
      %1885 = vmatpush1.msra.mxu0 0.0
      %1886 = vmatprep.subr.mxu0 0.0
      %1887 = vmatpush1.msra.mxu0 0.0
      %1888 = vmatprep.subr.mxu0 0.0
      %1889 = vmatpush1.msra.mxu0 0.0
      %1890 = vmatprep.subr.mxu0 0.0
      %1891 = vmatpush1.msra.mxu0 0.0
      %1892 = vmatprep.subr.mxu0 0.0
      %1893 = vmatpush1.msra.mxu0 0.0
      %1894 = vmatprep.subr.mxu0 0.0
      %1895 = vmatpush1.msra.mxu0 0.0
      %1896 = vmatprep.subr.mxu0 0.0
      %1897 = vmatpush1.msra.mxu0 0.0
      %1898 = vmatprep.subr.mxu0 0.0
      %1899 = vmatpush1.msra.mxu0 0.0
      %1900 = vmatprep.subr.mxu0 0.0
      %1901 = vmatpush1.msra.mxu0 0.0
      %1902 = vmatprep.subr.mxu0 0.0
      %1903 = vmatpush1.msra.mxu0 0.0
      %1904 = vmatprep.subr.mxu0 0.0
      %1905 = vmatpush1.msra.mxu0 0.0
      %1906 = vmatprep.subr.mxu0 0.0
      %1907 = vmatpush1.msra.mxu0 0.0
      %1908 = vmatprep.subr.mxu0 0.0
      %1909 = vmatpush1.msra.mxu0 0.0
      %1910 = vmatprep.subr.mxu0 0.0
      %1911 = vmatpush1.msra.mxu0 0.0
      %1912 = vmatprep.subr.mxu0 0.0
      %1913 = vmatpush1.msra.mxu0 0.0
      %1914 = vmatprep.subr.mxu0 0.0
      %1915 = vmatpush1.msra.mxu0 0.0
      %1916 = vmatprep.subr.mxu0 0.0
      %1917 = vmatpush1.msra.mxu0 0.0
      %1918 = vmatprep.subr.mxu0 0.0
      %1919 = vmatpush1.msra.mxu0 0.0
      %1920 = vmatprep.subr.mxu0 0.0
      %1921 = vmatpush1.msra.mxu0 0.0
      %1922 = vmatprep.subr.mxu0 0.0
      %1923 = vmatpush1.msra.mxu0 0.0
      %1924 = vmatprep.subr.mxu0 0.0
      %1925 = vmatpush1.msra.mxu0 0.0
      %1926 = vmatprep.mubr.f32.mxu0 0.0
      %1927 = vmatmul.mubr.f32.gmra.mrb[0].mxu0 %v1815
      %v1928 = vpop.f32.mrb[0].mxu0
      %v1929 = vadd.f32 0.0, %v1928
      %v1930 = vpop.f32.mrb[0].mxu0
      %1931 = vmatprep.mubr.f32.mxu0 0.0
      %1932 = vmatmul.mubr.f32.gmra.mrb[0].mxu0 %v1818
      %v1933 = vpop.f32.mrb[0].mxu0
      %v1934 = vadd.f32 0.0, %v1933
      %v1935 = vpop.f32.mrb[0].mxu0
      %1936 = vmatprep.mubr.f32.mxu0 0.0
      %1937 = vmatmul.mubr.f32.gmra.mrb[0].mxu0 %v1821
      %v1938 = vpop.f32.mrb[0].mxu0
      %v1939 = vadd.f32 0.0, %v1938
      %v1940 = vpop.f32.mrb[0].mxu0
      %1941 = vmatprep.mubr.f32.mxu0 0.0
      %1942 = vmatmul.mubr.f32.gmra.mrb[0].mxu0 %v1824
      %v1943 = vpop.f32.mrb[0].mxu0
      %v1944 = vadd.f32 0.0, %v1943
      %v1945 = vpop.f32.mrb[0].mxu0
      %1946 = vmatprep.mubr.f32.mxu0 0.0
      %1947 = vmatmul.mubr.f32.gmra.mrb[0].mxu0 %v1827
      %v1948 = vpop.f32.mrb[0].mxu0
      %v1949 = vadd.f32 0.0, %v1948
      %v1950 = vpop.f32.mrb[0].mxu0
      %1951 = vmatprep.mubr.f32.mxu0 0.0
      %1952 = vmatmul.mubr.f32.gmra.mrb[0].mxu0 %v1830
      %v1953 = vpop.f32.mrb[0].mxu0
      %v1954 = vadd.f32 0.0, %v1953
      %v1955 = vpop.f32.mrb[0].mxu0
      %1956 = vmatprep.mubr.f32.mxu0 0.0
      %1957 = vmatmul.mubr.f32.gmra.mrb[0].mxu0 %v1833
      %v1958 = vpop.f32.mrb[0].mxu0
      %v1959 = vadd.f32 0.0, %v1958
      %v1960 = vpop.f32.mrb[0].mxu0
      %1961 = vmatprep.mubr.f32.mxu0 0.0
      %1962 = vmatmul.mubr.f32.gmra.mrb[0].mxu0 %v1836
      %v1963 = vpop.f32.mrb[0].mxu0
      %v1964 = vadd.f32 0.0, %v1963
      %v1965 = vpop.f32.mrb[0].mxu0
      %1966 = vmatprep.mubr.f32.mxu0 0.0
      %1967 = vmatmul.mubr.f32.gmra.mrb[0].mxu0 %v1839
      %v1968 = vpop.f32.mrb[0].mxu0
      %v1969 = vadd.f32 0.0, %v1968
      %v1970 = vpop.f32.mrb[0].mxu0
      %1971 = vmatprep.mubr.f32.mxu0 0.0
      %1972 = vmatmul.mubr.f32.gmra.mrb[0].mxu0 %v1842
      %v1973 = vpop.f32.mrb[0].mxu0
      %v1974 = vadd.f32 0.0, %v1973
      %v1975 = vpop.f32.mrb[0].mxu0
      %1976 = vmatprep.mubr.f32.mxu0 0.0
      %1977 = vmatmul.mubr.f32.gmra.mrb[0].mxu0 %v1845
      %v1978 = vpop.f32.mrb[0].mxu0
      %v1979 = vadd.f32 0.0, %v1978
      %v1980 = vpop.f32.mrb[0].mxu0
      %1981 = vmatprep.mubr.f32.mxu0 0.0
      %1982 = vmatmul.mubr.f32.gmra.mrb[0].mxu0 %v1848
      %v1983 = vpop.f32.mrb[0].mxu0
      %v1984 = vadd.f32 0.0, %v1983
      %v1985 = vpop.f32.mrb[0].mxu0
      %1986 = vmatprep.mubr.f32.mxu0 0.0
      %1987 = vmatmul.mubr.f32.gmra.mrb[0].mxu0 %v1851
      %v1988 = vpop.f32.mrb[0].mxu0
      %v1989 = vadd.f32 0.0, %v1988
      %v1990 = vpop.f32.mrb[0].mxu0
      %1991 = vmatprep.mubr.f32.mxu0 0.0
      %1992 = vmatmul.mubr.f32.gmra.mrb[0].mxu0 %v1854
      %v1993 = vpop.f32.mrb[0].mxu0
      %v1994 = vadd.f32 0.0, %v1993
      %v1995 = vpop.f32.mrb[0].mxu0
      %1996 = vmatprep.mubr.f32.mxu0 0.0
      %1997 = vmatmul.mubr.f32.gmra.mrb[0].mxu0 %v1857
      %v1998 = vpop.f32.mrb[0].mxu0
      %v1999 = vadd.f32 0.0, %v1998
      %v2000 = vpop.f32.mrb[0].mxu0
      %2001 = vmatprep.mubr.f32.mxu0 0.0
      %2002 = vmatmul.mubr.f32.gmra.mrb[0].mxu0 %v1860
      %v2003 = vpop.f32.mrb[0].mxu0
      %v2004 = vadd.f32 0.0, %v2003
      %v2005 = vpop.f32.mrb[0].mxu0
      %2006 = vdwg.mxu0
      %v2007 = vadd.f32 %v1780, %v1929
      %v2008 = vadd.f32 %v1781, %v1934
      %v2009 = vadd.f32 %v1782, %v1939
      %v2010 = vadd.f32 %v1783, %v1944
      %v2011 = vadd.f32 %v1784, %v1949
      %v2012 = vadd.f32 %v1785, %v1954
      %v2013 = vadd.f32 %v1786, %v1959
      %v2014 = vadd.f32 %v1787, %v1964
      %v2015 = vadd.f32 %v1788, %v1969
      %v2016 = vadd.f32 %v1789, %v1974
      %v2017 = vadd.f32 %v1790, %v1979
      %v2018 = vadd.f32 %v1791, %v1984
      %v2019 = vadd.f32 %v1792, %v1989
      %v2020 = vadd.f32 %v1793, %v1994
      %v2021 = vadd.f32 %v1794, %v1999
      %v2022 = vadd.f32 %v1795, %v2004
      %v2023 = vld [vmem:[%s1568 + $0x2] sm:$0xff]
      %v2024 = vld [vmem:[%s1568 + $0xa] sm:$0xff]
      %v2025 = vld [vmem:[%s1568 + $0x1a] sm:$0xff]
      %v2026 = vld [vmem:[%s1568 + $0x22] sm:$0xff]
      %v2027 = vld [vmem:[%s1568 + $0x32] sm:$0xff]
      %v2028 = vld [vmem:[%s1568 + $0x3a] sm:$0xff]
      %v2029 = vld [vmem:[%s1568 + $0x4a] sm:$0xff]
      %v2030 = vld [vmem:[%s1568 + $0x52] sm:$0xff]
      %v2031 = vld [vmem:[%s1568 + $0x62] sm:$0xff]
      %v2032 = vld [vmem:[%s1568 + $0x6a] sm:$0xff]
      %v2033 = vld [vmem:[%s1568 + $0x7a] sm:$0xff]
      %v2034 = vld [vmem:[%s1568 + $0x82] sm:$0xff]
      %v2035 = vld [vmem:[%s1568 + $0x92] sm:$0xff]
      %v2036 = vld [vmem:[%s1568 + $0x9a] sm:$0xff]
      %v2037 = vld [vmem:[%s1568 + $0xaa] sm:$0xff]
      %v2038 = vld [vmem:[%s1568 + $0xb2] sm:$0xff]
      %s2039 = scalar_lea.vmem %s1, 64
      %v2040 = vld [vmem:[%s2039] sm:$0xff]
      %v2042 = vsel %vm272, %v2023, 0
      %v2045 = vsel %vm272, %v2024, 0
      %v2048 = vsel %vm272, %v2025, 0
      %v2051 = vsel %vm272, %v2026, 0
      %v2054 = vsel %vm272, %v2027, 0
      %v2057 = vsel %vm272, %v2028, 0
      %v2060 = vsel %vm272, %v2029, 0
      %v2063 = vsel %vm272, %v2030, 0
      %v2066 = vsel %vm272, %v2031, 0
      %v2069 = vsel %vm272, %v2032, 0
      %v2072 = vsel %vm272, %v2033, 0
      %v2075 = vsel %vm272, %v2034, 0
      %v2078 = vsel %vm272, %v2035, 0
      %v2081 = vsel %vm272, %v2036, 0
      %v2084 = vsel %vm272, %v2037, 0
      %v2087 = vsel %vm272, %v2038, 0
      %2089 = vmatprep.subr.mxu0 0.0
      %2090 = vmatpush1.msra.mxu0 %v2040
      %2091 = vmatprep.subr.mxu0 0.0
      %2092 = vmatpush1.msra.mxu0 0.0
      %2093 = vmatprep.subr.mxu0 0.0
      %2094 = vmatpush1.msra.mxu0 0.0
      %2095 = vmatprep.subr.mxu0 0.0
      %2096 = vmatpush1.msra.mxu0 0.0
      %2097 = vmatprep.subr.mxu0 0.0
      %2098 = vmatpush1.msra.mxu0 0.0
      %2099 = vmatprep.subr.mxu0 0.0
      %2100 = vmatpush1.msra.mxu0 0.0
      %2101 = vmatprep.subr.mxu0 0.0
      %2102 = vmatpush1.msra.mxu0 0.0
      %2103 = vmatprep.subr.mxu0 0.0
      %2104 = vmatpush1.msra.mxu0 0.0
      %2105 = vmatprep.subr.mxu0 0.0
      %2106 = vmatpush1.msra.mxu0 0.0
      %2107 = vmatprep.subr.mxu0 0.0
      %2108 = vmatpush1.msra.mxu0 0.0
      %2109 = vmatprep.subr.mxu0 0.0
      %2110 = vmatpush1.msra.mxu0 0.0
      %2111 = vmatprep.subr.mxu0 0.0
      %2112 = vmatpush1.msra.mxu0 0.0
      %2113 = vmatprep.subr.mxu0 0.0
      %2114 = vmatpush1.msra.mxu0 0.0
      %2115 = vmatprep.subr.mxu0 0.0
      %2116 = vmatpush1.msra.mxu0 0.0
      %2117 = vmatprep.subr.mxu0 0.0
      %2118 = vmatpush1.msra.mxu0 0.0
      %2119 = vmatprep.subr.mxu0 0.0
      %2120 = vmatpush1.msra.mxu0 0.0
      %2121 = vmatprep.subr.mxu0 0.0
      %2122 = vmatpush1.msra.mxu0 0.0
      %2123 = vmatprep.subr.mxu0 0.0
      %2124 = vmatpush1.msra.mxu0 0.0
      %2125 = vmatprep.subr.mxu0 0.0
      %2126 = vmatpush1.msra.mxu0 0.0
      %2127 = vmatprep.subr.mxu0 0.0
      %2128 = vmatpush1.msra.mxu0 0.0
      %2129 = vmatprep.subr.mxu0 0.0
      %2130 = vmatpush1.msra.mxu0 0.0
      %2131 = vmatprep.subr.mxu0 0.0
      %2132 = vmatpush1.msra.mxu0 0.0
      %2133 = vmatprep.subr.mxu0 0.0
      %2134 = vmatpush1.msra.mxu0 0.0
      %2135 = vmatprep.subr.mxu0 0.0
      %2136 = vmatpush1.msra.mxu0 0.0
      %2137 = vmatprep.subr.mxu0 0.0
      %2138 = vmatpush1.msra.mxu0 0.0
      %2139 = vmatprep.subr.mxu0 0.0
      %2140 = vmatpush1.msra.mxu0 0.0
      %2141 = vmatprep.subr.mxu0 0.0
      %2142 = vmatpush1.msra.mxu0 0.0
      %2143 = vmatprep.subr.mxu0 0.0
      %2144 = vmatpush1.msra.mxu0 0.0
      %2145 = vmatprep.subr.mxu0 0.0
      %2146 = vmatpush1.msra.mxu0 0.0
      %2147 = vmatprep.subr.mxu0 0.0
      %2148 = vmatpush1.msra.mxu0 0.0
      %2149 = vmatprep.subr.mxu0 0.0
      %2150 = vmatpush1.msra.mxu0 0.0
      %2151 = vmatprep.subr.mxu0 0.0
      %2152 = vmatpush1.msra.mxu0 0.0
      %2153 = vmatprep.mubr.f32.mxu0 0.0
      %2154 = vmatmul.mubr.f32.gmra.mrb[0].mxu0 %v2042
      %v2155 = vpop.f32.mrb[0].mxu0
      %v2156 = vadd.f32 0.0, %v2155
      %v2157 = vpop.f32.mrb[0].mxu0
      %2158 = vmatprep.mubr.f32.mxu0 0.0
      %2159 = vmatmul.mubr.f32.gmra.mrb[0].mxu0 %v2045
      %v2160 = vpop.f32.mrb[0].mxu0
      %v2161 = vadd.f32 0.0, %v2160
      %v2162 = vpop.f32.mrb[0].mxu0
      %2163 = vmatprep.mubr.f32.mxu0 0.0
      %2164 = vmatmul.mubr.f32.gmra.mrb[0].mxu0 %v2048
      %v2165 = vpop.f32.mrb[0].mxu0
      %v2166 = vadd.f32 0.0, %v2165
      %v2167 = vpop.f32.mrb[0].mxu0
      %2168 = vmatprep.mubr.f32.mxu0 0.0
      %2169 = vmatmul.mubr.f32.gmra.mrb[0].mxu0 %v2051
      %v2170 = vpop.f32.mrb[0].mxu0
      %v2171 = vadd.f32 0.0, %v2170
      %v2172 = vpop.f32.mrb[0].mxu0
      %2173 = vmatprep.mubr.f32.mxu0 0.0
      %2174 = vmatmul.mubr.f32.gmra.mrb[0].mxu0 %v2054
      %v2175 = vpop.f32.mrb[0].mxu0
      %v2176 = vadd.f32 0.0, %v2175
      %v2177 = vpop.f32.mrb[0].mxu0
      %2178 = vmatprep.mubr.f32.mxu0 0.0
      %2179 = vmatmul.mubr.f32.gmra.mrb[0].mxu0 %v2057
      %v2180 = vpop.f32.mrb[0].mxu0
      %v2181 = vadd.f32 0.0, %v2180
      %v2182 = vpop.f32.mrb[0].mxu0
      %2183 = vmatprep.mubr.f32.mxu0 0.0
      %2184 = vmatmul.mubr.f32.gmra.mrb[0].mxu0 %v2060
      %v2185 = vpop.f32.mrb[0].mxu0
      %v2186 = vadd.f32 0.0, %v2185
      %v2187 = vpop.f32.mrb[0].mxu0
      %2188 = vmatprep.mubr.f32.mxu0 0.0
      %2189 = vmatmul.mubr.f32.gmra.mrb[0].mxu0 %v2063
      %v2190 = vpop.f32.mrb[0].mxu0
      %v2191 = vadd.f32 0.0, %v2190
      %v2192 = vpop.f32.mrb[0].mxu0
      %2193 = vmatprep.mubr.f32.mxu0 0.0
      %2194 = vmatmul.mubr.f32.gmra.mrb[0].mxu0 %v2066
      %v2195 = vpop.f32.mrb[0].mxu0
      %v2196 = vadd.f32 0.0, %v2195
      %v2197 = vpop.f32.mrb[0].mxu0
      %2198 = vmatprep.mubr.f32.mxu0 0.0
      %2199 = vmatmul.mubr.f32.gmra.mrb[0].mxu0 %v2069
      %v2200 = vpop.f32.mrb[0].mxu0
      %v2201 = vadd.f32 0.0, %v2200
      %v2202 = vpop.f32.mrb[0].mxu0
      %2203 = vmatprep.mubr.f32.mxu0 0.0
      %2204 = vmatmul.mubr.f32.gmra.mrb[0].mxu0 %v2072
      %v2205 = vpop.f32.mrb[0].mxu0
      %v2206 = vadd.f32 0.0, %v2205
      %v2207 = vpop.f32.mrb[0].mxu0
      %2208 = vmatprep.mubr.f32.mxu0 0.0
      %2209 = vmatmul.mubr.f32.gmra.mrb[0].mxu0 %v2075
      %v2210 = vpop.f32.mrb[0].mxu0
      %v2211 = vadd.f32 0.0, %v2210
      %v2212 = vpop.f32.mrb[0].mxu0
      %2213 = vmatprep.mubr.f32.mxu0 0.0
      %2214 = vmatmul.mubr.f32.gmra.mrb[0].mxu0 %v2078
      %v2215 = vpop.f32.mrb[0].mxu0
      %v2216 = vadd.f32 0.0, %v2215
      %v2217 = vpop.f32.mrb[0].mxu0
      %2218 = vmatprep.mubr.f32.mxu0 0.0
      %2219 = vmatmul.mubr.f32.gmra.mrb[0].mxu0 %v2081
      %v2220 = vpop.f32.mrb[0].mxu0
      %v2221 = vadd.f32 0.0, %v2220
      %v2222 = vpop.f32.mrb[0].mxu0
      %2223 = vmatprep.mubr.f32.mxu0 0.0
      %2224 = vmatmul.mubr.f32.gmra.mrb[0].mxu0 %v2084
      %v2225 = vpop.f32.mrb[0].mxu0
      %v2226 = vadd.f32 0.0, %v2225
      %v2227 = vpop.f32.mrb[0].mxu0
      %2228 = vmatprep.mubr.f32.mxu0 0.0
      %2229 = vmatmul.mubr.f32.gmra.mrb[0].mxu0 %v2087
      %v2230 = vpop.f32.mrb[0].mxu0
      %v2231 = vadd.f32 0.0, %v2230
      %v2232 = vpop.f32.mrb[0].mxu0
      %2233 = vdwg.mxu0
      %v2234 = vadd.f32 %v2007, %v2156
      %v2235 = vadd.f32 %v2008, %v2161
      %v2236 = vadd.f32 %v2009, %v2166
      %v2237 = vadd.f32 %v2010, %v2171
      %v2238 = vadd.f32 %v2011, %v2176
      %v2239 = vadd.f32 %v2012, %v2181
      %v2240 = vadd.f32 %v2013, %v2186
      %v2241 = vadd.f32 %v2014, %v2191
      %v2242 = vadd.f32 %v2015, %v2196
      %v2243 = vadd.f32 %v2016, %v2201
      %v2244 = vadd.f32 %v2017, %v2206
      %v2245 = vadd.f32 %v2018, %v2211
      %v2246 = vadd.f32 %v2019, %v2216
      %v2247 = vadd.f32 %v2020, %v2221
      %v2248 = vadd.f32 %v2021, %v2226
      %v2249 = vadd.f32 %v2022, %v2231
      %v2250 = vld [vmem:[%s2] sm:$0x1]
      %v2252 = vlaneseq
      %v2253 = vshrl.u32 %v2252, 7
      %v2254 = vsub.s32 0, %v2253
      %v2255 = vrot.slane %v2250, %v2254
      %v2257 = vmul.f32 %v2234, %v2255
      %v2258 = vmul.f32 %v2235, %v2255
      %v2259 = vmul.f32 %v2236, %v2255
      %v2260 = vmul.f32 %v2237, %v2255
      %v2261 = vmul.f32 %v2238, %v2255
      %v2262 = vmul.f32 %v2239, %v2255
      %v2263 = vmul.f32 %v2240, %v2255
      %v2264 = vmul.f32 %v2241, %v2255
      %v2265 = vmul.f32 %v2242, %v2255
      %v2266 = vmul.f32 %v2243, %v2255
      %v2267 = vmul.f32 %v2244, %v2255
      %v2268 = vmul.f32 %v2245, %v2255
      %v2269 = vmul.f32 %v2246, %v2255
      %v2270 = vmul.f32 %v2247, %v2255
      %v2271 = vmul.f32 %v2248, %v2255
      %v2272 = vmul.f32 %v2249, %v2255
      %v2273 = vld [vmem:[%s3] sm:$0x1]
      %v2275 = vlaneseq
      %v2276 = vshrl.u32 %v2275, 7
      %v2277 = vsub.s32 0, %v2276
      %v2278 = vrot.slane %v2273, %v2277
      %v2280 = vadd.f32 %v2257, %v2278
      %v2281 = vadd.f32 %v2258, %v2278
      %v2282 = vadd.f32 %v2259, %v2278
      %v2283 = vadd.f32 %v2260, %v2278
      %v2284 = vadd.f32 %v2261, %v2278
      %v2285 = vadd.f32 %v2262, %v2278
      %v2286 = vadd.f32 %v2263, %v2278
      %v2287 = vadd.f32 %v2264, %v2278
      %v2288 = vadd.f32 %v2265, %v2278
      %v2289 = vadd.f32 %v2266, %v2278
      %v2290 = vadd.f32 %v2267, %v2278
      %v2291 = vadd.f32 %v2268, %v2278
      %v2292 = vadd.f32 %v2269, %v2278
      %v2293 = vadd.f32 %v2270, %v2278
      %v2294 = vadd.f32 %v2271, %v2278
      %v2295 = vadd.f32 %v2272, %v2278
      %v2296 = vmax.f32 %v2280, 0.0
      %v2297 = vmax.f32 %v2281, 0.0
      %v2298 = vmax.f32 %v2282, 0.0
      %v2299 = vmax.f32 %v2283, 0.0
      %v2300 = vmax.f32 %v2284, 0.0
      %v2301 = vmax.f32 %v2285, 0.0
      %v2302 = vmax.f32 %v2286, 0.0
      %v2303 = vmax.f32 %v2287, 0.0
      %v2304 = vmax.f32 %v2288, 0.0
      %v2305 = vmax.f32 %v2289, 0.0
      %v2306 = vmax.f32 %v2290, 0.0
      %v2307 = vmax.f32 %v2291, 0.0
      %v2308 = vmax.f32 %v2292, 0.0
      %v2309 = vmax.f32 %v2293, 0.0
      %v2310 = vmax.f32 %v2294, 0.0
      %v2311 = vmax.f32 %v2295, 0.0
      %2312 = vst [vmem:[%s235] sm:$0xff] %v2296
      %2313 = vst [vmem:[%s235 + $0x8] sm:$0xff] %v2297
      %2314 = vst [vmem:[%s235 + $0x10] sm:$0xff] %v2298
      %2315 = vst [vmem:[%s235 + $0x18] sm:$0xff] %v2299
      %2316 = vst [vmem:[%s235 + $0x20] sm:$0xff] %v2300
      %2317 = vst [vmem:[%s235 + $0x28] sm:$0xff] %v2301
      %2318 = vst [vmem:[%s235 + $0x30] sm:$0xff] %v2302
      %2319 = vst [vmem:[%s235 + $0x38] sm:$0xff] %v2303
      %2320 = vst [vmem:[%s235 + $0x40] sm:$0xff] %v2304
      %2321 = vst [vmem:[%s235 + $0x48] sm:$0xff] %v2305
      %2322 = vst [vmem:[%s235 + $0x50] sm:$0xff] %v2306
      %2323 = vst [vmem:[%s235 + $0x58] sm:$0xff] %v2307
      %2324 = vst [vmem:[%s235 + $0x60] sm:$0xff] %v2308
      %2325 = vst [vmem:[%s235 + $0x68] sm:$0xff] %v2309
      %2326 = vst [vmem:[%s235 + $0x70] sm:$0xff] %v2310
      %2327 = vst [vmem:[%s235 + $0x78] sm:$0xff] %v2311
      %s2328 = smul.u32 8, %s20
      %p2329 = scmp.lt.s32.totalorder %s19, 1
      %s2330 = scalar_select %p2329, %s19, 1
      %p2331 = scmp.lt.s32.totalorder %s2328, 15
      %s2332 = scalar_select %p2331, %s2328, 15
      %s2333 = smul.addr %s2332, 2
      %s2334 = smul.addr %s2330, 32
      %s2335 = sadd.s32 %s2333, %s2334
      %s2336 = smul.addr %s2335, 8
      %s2337 = scalar_lea.vmem %s4, %s2336
      // Predicated region
      $region37: #{decoder_block_forward.2} parent=35 // pred_check
        %p2338 = pneg %p138
      $region38: #{decoder_block_forward.2} parent=35 // pred_check_branch
        %2340 = sbr.rel (%p2338) target = $region40
      $region39: #{decoder_block_forward.2} parent=35 // pred_region
        %s2341 = smul.u32 8, %s20
      $region40: #{decoder_block_forward.2} parent=35 // pred_fallthru
        _
    $region36: #{decoder_block_forward.2} parent=5 // pred_fallthru
      _
    %p2342 = scmp.le.s32.totalorder 2, %s10
    // Predicated region
    $region41: #{decoder_block_forward.2} parent=5 // pred_check
      %p2343 = pneg %p2342
    $region42: #{decoder_block_forward.2} parent=5 // pred_check_branch
      %2345 = sbr.rel (%p2343) target = $region44
    $region43: #{decoder_block_forward.2} parent=5 // pred_region
      %s2346 = ssub.s32 %s10, 2
      // Predicated region
      $region45: #{decoder_block_forward.2} parent=43 // pred_check
        %p2347 = pneg %p144
      $region46: #{decoder_block_forward.2} parent=43 // pred_check_branch
        %2349 = sbr.rel (%p2347) target = $region48
      $region47: #{decoder_block_forward.2} parent=43 // pred_region
        %s2350 = smul.u32 8, %s22
        %p2351 = scmp.lt.s32.totalorder %s21, 1
        %s2352 = scalar_select %p2351, %s21, 1
        %p2353 = scmp.lt.s32.totalorder %s2350, 15
        %s2354 = scalar_select %p2353, %s2350, 15
        %s2355 = smul.addr %s2354, 2
        %s2356 = smul.addr %s2352, 32
        %s2357 = sadd.s32 %s2355, %s2356
        %s2358 = smul.addr %s2357, 8
        %s2359 = scalar_lea.vmem %s4, %s2358
      $region48: #{decoder_block_forward.2} parent=43 // pred_fallthru
        _
    $region44: #{decoder_block_forward.2} parent=5 // pred_fallthru
      _
  $region6: #{decoder_block_forward.2} parent=0 // loop_footer
    %s14 = sadd.s32 1, %s10
  $region7: #{decoder_block_forward.2} parent=0 // loop_footer_branch
    %9 = sbr.rel target = $region3
  $region8: #{decoder_block_forward.2} parent=0 // loop_exit
    _

</llo_original>
